<compile_context>
chip_gen: v7x
topology: tpu7x:2x2x1
jax: 0.10.0
libtpu: 0.0.40
codegen_flags: <defaults>
</compile_context>

<pallas_src>
import math

import jax
import jax.numpy as jnp
from jax import lax
from jax.experimental import pallas as pl
from jax.experimental.pallas import tpu as pltpu


def _mhsa_kernel(xfull_ref, xtile_ref, wkv_ref, bkv_ref, wq_ref, bq_ref,
                 gamma_ref, wc_ref, bc_ref, o_ref, kv_ref, q_ref):
    # xfull_ref: (1, C, HW)  full spatial slab (only read at qt == 0)
    # xtile_ref: (1, C, TQ)  current query tile of x (residual + Q projection)
    # wkv_ref:   (NKV, C), bkv_ref: (NKV, 1)   stacked [k_pad; v] per head
    # wq_ref:    (NQR, C), bq_ref:  (NQR, 1)   stacked q_pad per head
    # gamma_ref: (NH,) SMEM; wc_ref: (NH, C, C); bc_ref: (C, 1)
    # o_ref:     (1, C, TQ)
    # kv_ref:    (NKV, HW) f32 scratch (staged K/V);  q_ref: (NQR, TQ) scratch
    qt = pl.program_id(1)
    C = xtile_ref.shape[1]
    TQ = xtile_ref.shape[2]
    NH = wc_ref.shape[0]
    NQR = wq_ref.shape[0]
    QPAD = NQR // NH
    KVSTRIDE = wkv_ref.shape[0] // NH

    # --- stage fused K/V projections once per batch sample (qt == 0) --------
    # One (NKV, C) x (C, HW) MXU call instead of 2 * NH tiny per-head matmuls.
    @pl.when(qt == 0)
    def _():
        kv_ref[...] = (jnp.dot(wkv_ref[...], xfull_ref[0],
                               preferred_element_type=jnp.float32)
                       + bkv_ref[...])

    x_tile = xtile_ref[0]                                      # (C, TQ)

    # --- fused Q projections for this query tile (all heads at once) --------
    q_ref[...] = (jnp.dot(wq_ref[...], x_tile,
                          preferred_element_type=jnp.float32) + bq_ref[...])

    # Final 1x1 conv bias; broadcast hoisted out of the head loop.
    acc0 = jnp.broadcast_to(bc_ref[...], (C, TQ))

    def head_body(h, acc):
        qs = pl.multiple_of(h * QPAD, 8)
        ks = pl.multiple_of(h * KVSTRIDE, 8)
        vs = pl.multiple_of(h * KVSTRIDE + QPAD, 8)
        q = q_ref[pl.ds(qs, QPAD), :]                          # (QPAD, TQ)
        k = kv_ref[pl.ds(ks, QPAD), :]                         # (QPAD, HW)
        v = kv_ref[pl.ds(vs, C), :]                            # (C, HW)

        # energy_T[j, i] = sum_d k[d, j] * q[d, i] -> (HW, TQ).  Transposed
        # form keeps both big matmuls canonical (no (HW, TQ) relayout); the
        # zero-padded q/k rows contribute exactly zero.  bf16 operands feed
        # the MXU at native rate; accumulation stays f32.
        e_t = lax.dot_general(k.astype(jnp.bfloat16), q.astype(jnp.bfloat16),
                              (((0,), (0,)), ((), ())),
                              preferred_element_type=jnp.float32)

        # Softmax over keys (axis 0); math kept in f32 (v5e VPU/EUP).
        m = jnp.max(e_t, axis=0, keepdims=True)                # (1, TQ)
        p = jnp.exp(e_t - m)                                   # unnormalized
        colsum = jnp.sum(p, axis=0, keepdims=True)             # (1, TQ)

        # attn_out_raw[c, i] = sum_j v[c, j] * p[j, i]  -- canonical matmul.
        attn_raw = lax.dot_general(v.astype(jnp.bfloat16),
                                   p.astype(jnp.bfloat16),
                                   (((1,), (0,)), ((), ())),
                                   preferred_element_type=jnp.float32)

        # Normalization deferred past the matmul: one (1, TQ) scale (gamma
        # folded in, EUP approx reciprocal) instead of dividing (HW, TQ).
        scale = gamma_ref[h] * pl.reciprocal(colsum, approx=True)
        head_out = scale * attn_raw + x_tile                   # residual

        # Fused final 1x1 conv: accumulate this head's channel block of Wc.
        return acc + jnp.dot(wc_ref[h], head_out,
                             preferred_element_type=jnp.float32)

    # fori_loop (not a static unroll) bounds the per-head (HW, TQ) live ranges.
    acc = lax.fori_loop(0, NH, head_body, acc0)
    o_ref[0] = acc


def multi_head_self_attention(x, wq, bq, wk, bk, wv, bv, gamma, wc, bc, *, tq=None):
    """x: (B, C, H, W) f32.
    wq/wk: (NH, CQ, C), bq/bk: (NH, CQ), wv: (NH, C, C), bv: (NH, C),
    gamma: (NH,), wc: (C, NH*C), bc: (C,)."""
    B, C, H, W = x.shape
    HW = H * W
    NH, CQ, _ = wq.shape
    assert C >= 16 and C % 8 == 0, "channel count must be a multiple of 8 (and >= 16)"
    # TODO(synk): for HW not a multiple of 128, pad the spatial axis and mask the
    # padded key columns out of the softmax (and drop the padded query columns).
    assert HW % 128 == 0, "spatial size must be lane-dense (multiple of 128)"
    if tq is None:
        tq = min(HW, 512)
    assert tq % 128 == 0 and HW % tq == 0
    nq = HW // tq
    # TODO(synk): for very large HW, add an inner KV-tile loop with online softmax
    # (flash-style) so the (HW, TQ) intermediate is also capped on the key axis.

    QPAD = -(-CQ // 8) * 8                     # pad q/k rows to a sublane multiple
    NQR = NH * QPAD
    KVSTRIDE = QPAD + C
    NKV = NH * KVSTRIDE

    x3 = x.reshape(B, C, HW)

    # Stacked projection weights/biases (padded rows are exactly zero).
    wq_p = jnp.pad(wq, ((0, 0), (0, QPAD - CQ), (0, 0)))
    wk_p = jnp.pad(wk, ((0, 0), (0, QPAD - CQ), (0, 0)))
    bq_p = jnp.pad(bq, ((0, 0), (0, QPAD - CQ)))
    bk_p = jnp.pad(bk, ((0, 0), (0, QPAD - CQ)))
    wq_stack = wq_p.reshape(NQR, C)
    bq_stack = bq_p.reshape(NQR, 1)
    wkv_stack = jnp.concatenate([wk_p, wv], axis=1).reshape(NKV, C)
    bkv_stack = jnp.concatenate([bk_p, bv], axis=1).reshape(NKV, 1)

    wc_stack = wc.reshape(C, NH, C).transpose(1, 0, 2)         # (NH, C, C) blocks
    bc2 = bc.reshape(C, 1)

    # Advisory cost estimate for XLA scheduling around the custom call.
    flops = B * (2 * C * HW * (NKV + NQR)
                 + NH * (2 * QPAD * HW * HW + 2 * C * HW * HW + 2 * C * C * HW))
    cost = pl.CostEstimate(
        flops=int(flops),
        transcendentals=int(B * NH * HW * HW),
        bytes_accessed=int(4 * (3 * B * C * HW + wq_stack.size + wkv_stack.size
                                + wc_stack.size)),
    )

    # Explicit VMEM budget: resident weights + double-buffered I/O blocks +
    # staging scratches + per-head temporaries; clamped below v7x's 64 MiB.
    vmem_bytes = 4 * (wq_stack.size + bq_stack.size + wkv_stack.size
                      + bkv_stack.size + wc_stack.size + bc2.size
                      + 2 * C * HW + 2 * C * tq + 2 * C * tq    # x_full, x_tile, out
                      + NKV * HW + NQR * tq                     # scratches
                      + 3 * HW * tq + 8 * C * tq)               # head temporaries
    vmem_limit = int(min(max(vmem_bytes + (8 << 20), 32 << 20), 56 << 20))

    out = pl.pallas_call(
        _mhsa_kernel,
        out_shape=jax.ShapeDtypeStruct((B, C, HW), jnp.float32),
        grid=(B, nq),
        in_specs=[
            pl.BlockSpec((1, C, HW), lambda b, q: (b, 0, 0)),   # x, full slab
            pl.BlockSpec((1, C, tq), lambda b, q: (b, 0, q)),   # x, query tile
            pl.BlockSpec((NKV, C), lambda b, q: (0, 0)),        # stacked K/V weights
            pl.BlockSpec((NKV, 1), lambda b, q: (0, 0)),        # stacked K/V bias
            pl.BlockSpec((NQR, C), lambda b, q: (0, 0)),        # stacked Q weights
            pl.BlockSpec((NQR, 1), lambda b, q: (0, 0)),        # stacked Q bias
            pl.BlockSpec(memory_space=pltpu.MemorySpace.SMEM),  # gamma
            pl.BlockSpec((NH, C, C), lambda b, q: (0, 0, 0)),   # wc per-head blocks
            pl.BlockSpec((C, 1), lambda b, q: (0, 0)),          # bc
        ],
        out_specs=pl.BlockSpec((1, C, tq), lambda b, q: (b, 0, q)),
        scratch_shapes=[
            pltpu.VMEM((NKV, HW), jnp.float32),                 # staged K/V (per b)
            pltpu.VMEM((NQR, tq), jnp.float32),                 # staged Q (per tile)
        ],
        compiler_params=pltpu.CompilerParams(
            dimension_semantics=("parallel", "arbitrary"),
            vmem_limit_bytes=vmem_limit,
        ),
        cost_estimate=cost,
    )(x3, x3, wkv_stack, bkv_stack, wq_stack, bq_stack, gamma, wc_stack, bc2)
    return out.reshape(B, C, H, W)


def _reference(x, wq, bq, wk, bk, wv, bv, gamma, wc, bc):
    B, C, H, W = x.shape
    HW = H * W
    P = lax.Precision.HIGHEST
    xf = x.reshape(B, C, HW)
    NH = wq.shape[0]
    heads = []
    for h in range(NH):
        q = jnp.einsum('dc,bcp->bdp', wq[h], xf, precision=P) + bq[h][None, :, None]
        k = jnp.einsum('dc,bcp->bdp', wk[h], xf, precision=P) + bk[h][None, :, None]
        v = jnp.einsum('dc,bcp->bdp', wv[h], xf, precision=P) + bv[h][None, :, None]
        e = jnp.einsum('bdi,bdj->bij', q, k, precision=P)
        a = jax.nn.softmax(e, axis=-1)
        o = jnp.einsum('bcj,bij->bci', v, a, precision=P)
        heads.append(gamma[h] * o + xf)
    cat = jnp.concatenate(heads, axis=1)                        # (B, NH*C, HW)
    out = jnp.einsum('ck,bkp->bcp', wc, cat, precision=P) + bc[None, :, None]
    return out.reshape(B, C, H, W)


if __name__ == "__main__":
    # Module config: in_channels = C (needs C >= 16 so C // 16 > 0), num_heads = NH.
    B, C, H, W = 2, 32, 16, 16       # HW = 256 (lane-dense)
    NH = 4
    CQ = C // 16                     # 2

    key = jax.random.PRNGKey(0)
    ks = jax.random.split(key, 10)

    x = jax.random.normal(ks[0], (B, C, H, W), dtype=jnp.float32)

    # Deterministic Conv2d-like init (uniform with bound 1/sqrt(fan_in)).
    bound = 1.0 / math.sqrt(C)
    wq = jax.random.uniform(ks[1], (NH, CQ, C), jnp.float32, -bound, bound)
    bq = jax.random.uniform(ks[2], (NH, CQ), jnp.float32, -bound, bound)
    wk = jax.random.uniform(ks[3], (NH, CQ, C), jnp.float32, -bound, bound)
    bk = jax.random.uniform(ks[4], (NH, CQ), jnp.float32, -bound, bound)
    wv = jax.random.uniform(ks[5], (NH, C, C), jnp.float32, -bound, bound)
    bv = jax.random.uniform(ks[6], (NH, C), jnp.float32, -bound, bound)
    # PyTorch initializes gamma to zero (making head_out == x); use nonzero values
    # so the attention path is actually exercised by the check.
    gamma = 0.5 * jax.random.normal(ks[7], (NH,), jnp.float32)
    bound_c = 1.0 / math.sqrt(NH * C)
    wc = jax.random.uniform(ks[8], (C, NH * C), jnp.float32, -bound_c, bound_c)
    bc = jax.random.uniform(ks[9], (C,), jnp.float32, -bound_c, bound_c)

    # tq=128 -> 2 query tiles so the query-tile grid axis is actually exercised.
    out = multi_head_self_attention(x, wq, bq, wk, bk, wv, bv, gamma, wc, bc, tq=128)
    out = jax.block_until_ready(out)

    ref = _reference(x, wq, bq, wk, bk, wv, bv, gamma, wc, bc)
    assert out.shape == (B, C, H, W)
    max_err = float(jnp.max(jnp.abs(out - ref)))
    # Tolerance loosened slightly vs a Precision.HIGHEST f32 reference because the
    # two O(HW^2) matmuls use bf16 operands (f32 accumulation) + approx reciprocal.
    assert jnp.allclose(out, ref, atol=1e-2, rtol=1e-2), f"max_err={max_err}"

    print("KERNEL_OK")
</pallas_src>

<mosaic_0001>
module attributes {stable_mosaic.version = 11 : i64} {
  func.func @_mhsa_kernel(%arg0: i32, %arg1: i32, %arg2: memref<1x32x256xf32, #tpu.memory_space<vmem>>, %arg3: memref<1x32x128xf32, #tpu.memory_space<vmem>>, %arg4: memref<160x32xf32, #tpu.memory_space<vmem>>, %arg5: memref<160x1xf32, #tpu.memory_space<vmem>>, %arg6: memref<32x32xf32, #tpu.memory_space<vmem>>, %arg7: memref<32x1xf32, #tpu.memory_space<vmem>>, %arg8: memref<4xf32, #tpu.memory_space<smem>>, %arg9: memref<4x32x32xf32, #tpu.memory_space<vmem>>, %arg10: memref<32x1xf32, #tpu.memory_space<vmem>>, %arg11: memref<1x32x128xf32, #tpu.memory_space<vmem>>, %arg12: memref<160x256xf32, #tpu.memory_space<vmem>>, %arg13: memref<32x128xf32, #tpu.memory_space<vmem>>) attributes {dimension_semantics = [#tpu.dimension_semantics<parallel>, #tpu.dimension_semantics<arbitrary>], iteration_bounds = array<i64: 2, 2>, scalar_prefetch = 0 : i64, scratch_operands = 2 : i64, tpu.core_type = #tpu.core_type<tc>, window_params = [{transform_indices = @transform_0, window_bounds = array<i64: 1, 32, 256>}, {transform_indices = @transform_1, window_bounds = array<i64: 1, 32, 128>}, {pipeline_mode = #tpu.pipeline_mode<synchronous>, transform_indices = @transform_2, window_bounds = array<i64: 160, 32>}, {pipeline_mode = #tpu.pipeline_mode<synchronous>, transform_indices = @transform_3, window_bounds = array<i64: 160, 1>}, {pipeline_mode = #tpu.pipeline_mode<synchronous>, transform_indices = @transform_4, window_bounds = array<i64: 32, 32>}, {pipeline_mode = #tpu.pipeline_mode<synchronous>, transform_indices = @transform_5, window_bounds = array<i64: 32, 1>}, {transform_indices = @transform_6, window_bounds = array<i64: 4>}, {pipeline_mode = #tpu.pipeline_mode<synchronous>, transform_indices = @transform_7, window_bounds = array<i64: 4, 32, 32>}, {pipeline_mode = #tpu.pipeline_mode<synchronous>, transform_indices = @transform_8, window_bounds = array<i64: 32, 1>}, {transform_indices = @transform_9, window_bounds = array<i64: 1, 32, 128>}]} {
    %c0_i32 = arith.constant 0 : i32
    %0 = arith.cmpi eq, %arg1, %c0_i32 : i32
    %1 = arith.extui %0 : i1 to i32
    %c0_i32_0 = arith.constant 0 : i32
    %2 = arith.cmpi ne, %1, %c0_i32_0 : i32
    scf.if %2 {
      %c0_16 = arith.constant 0 : index
      %c0_17 = arith.constant 0 : index
      %19 = vector.load %arg4[%c0_16, %c0_17] : memref<160x32xf32, #tpu.memory_space<vmem>>, vector<160x32xf32>
      %c0_18 = arith.constant 0 : index
      %c0_19 = arith.constant 0 : index
      %c0_20 = arith.constant 0 : index
      %20 = vector.load %arg2[%c0_18, %c0_19, %c0_20] : memref<1x32x256xf32, #tpu.memory_space<vmem>>, vector<1x32x256xf32>
      %21 = vector.shape_cast %20 : vector<1x32x256xf32> to vector<32x256xf32>
      %cst_21 = arith.constant dense<0.000000e+00> : vector<160x256xf32>
      %22 = tpu.matmul %19, %21, %cst_21 {dimension_numbers = #tpu.dot_dimension_numbers<[1], [0], [0], [1], [0, 0, 1, 1], [], []>} : vector<160x32xf32>, vector<32x256xf32>, vector<160x256xf32> -> vector<160x256xf32>
      %c0_22 = arith.constant 0 : index
      %c0_23 = arith.constant 0 : index
      %23 = vector.load %arg5[%c0_22, %c0_23] : memref<160x1xf32, #tpu.memory_space<vmem>>, vector<160x1xf32>
      %24 = vector.broadcast %23 : vector<160x1xf32> to vector<160x256xf32>
      %25 = arith.addf %22, %24 : vector<160x256xf32>
      %c0_24 = arith.constant 0 : index
      %c0_25 = arith.constant 0 : index
      %26 = vector.load %arg12[%c0_24, %c0_25] : memref<160x256xf32, #tpu.memory_space<vmem>>, vector<160x256xf32>
      tpu.vector_store %arg12[%c0_24, %c0_25], %25 {strides = array<i32>} : memref<160x256xf32, #tpu.memory_space<vmem>>, vector<160x256xf32>,
    } else {
    }
    %c0 = arith.constant 0 : index
    %c0_1 = arith.constant 0 : index
    %c0_2 = arith.constant 0 : index
    %3 = vector.load %arg3[%c0, %c0_1, %c0_2] : memref<1x32x128xf32, #tpu.memory_space<vmem>>, vector<1x32x128xf32>
    %4 = vector.shape_cast %3 : vector<1x32x128xf32> to vector<32x128xf32>
    %c0_3 = arith.constant 0 : index
    %c0_4 = arith.constant 0 : index
    %5 = vector.load %arg6[%c0_3, %c0_4] : memref<32x32xf32, #tpu.memory_space<vmem>>, vector<32x32xf32>
    %cst = arith.constant dense<0.000000e+00> : vector<32x128xf32>
    %6 = tpu.matmul %5, %4, %cst {dimension_numbers = #tpu.dot_dimension_numbers<[1], [0], [0], [1], [0, 0, 1, 1], [], []>} : vector<32x32xf32>, vector<32x128xf32>, vector<32x128xf32> -> vector<32x128xf32>
    %c0_5 = arith.constant 0 : index
    %c0_6 = arith.constant 0 : index
    %7 = vector.load %arg7[%c0_5, %c0_6] : memref<32x1xf32, #tpu.memory_space<vmem>>, vector<32x1xf32>
    %8 = vector.broadcast %7 : vector<32x1xf32> to vector<32x128xf32>
    %9 = arith.addf %6, %8 : vector<32x128xf32>
    %c0_7 = arith.constant 0 : index
    %c0_8 = arith.constant 0 : index
    %10 = vector.load %arg13[%c0_7, %c0_8] : memref<32x128xf32, #tpu.memory_space<vmem>>, vector<32x128xf32>
    tpu.vector_store %arg13[%c0_7, %c0_8], %9 {strides = array<i32>} : memref<32x128xf32, #tpu.memory_space<vmem>>, vector<32x128xf32>,
    %c0_9 = arith.constant 0 : index
    %c0_10 = arith.constant 0 : index
    %11 = vector.load %arg10[%c0_9, %c0_10] : memref<32x1xf32, #tpu.memory_space<vmem>>, vector<32x1xf32>
    %12 = vector.shape_cast %11 : vector<32x1xf32> to vector<32x1xf32>
    %13 = vector.broadcast %12 : vector<32x1xf32> to vector<32x128xf32>
    %c0_i32_11 = arith.constant 0 : i32
    %c4_i32 = arith.constant 4 : i32
    %14 = arith.addi %c0_i32_11, %c4_i32 : i32
    %c1_i32 = arith.constant 1 : i32
    %15 = scf.for %arg14 = %c0_i32_11 to %14 step %c1_i32 iter_args(%arg15 = %13) -> (vector<32x128xf32>)  : i32 {
      %c8_i32 = arith.constant 8 : i32
      %19 = arith.muli %arg14, %c8_i32 : i32
      %20 = tpu.assume_multiple %19, 8 : i32
      %c40_i32 = arith.constant 40 : i32
      %21 = arith.muli %arg14, %c40_i32 : i32
      %22 = tpu.assume_multiple %21, 8 : i32
      %c40_i32_16 = arith.constant 40 : i32
      %23 = arith.muli %arg14, %c40_i32_16 : i32
      %c8_i32_17 = arith.constant 8 : i32
      %24 = arith.addi %23, %c8_i32_17 : i32
      %25 = tpu.assume_multiple %24, 8 : i32
      %26 = arith.index_cast %20 : i32 to index
      %c0_18 = arith.constant 0 : index
      %27 = vector.load %arg13[%26, %c0_18] : memref<32x128xf32, #tpu.memory_space<vmem>>, vector<8x128xf32>
      %28 = arith.index_cast %22 : i32 to index
      %c0_19 = arith.constant 0 : index
      %29 = vector.load %arg12[%28, %c0_19] : memref<160x256xf32, #tpu.memory_space<vmem>>, vector<8x256xf32>
      %30 = arith.index_cast %25 : i32 to index
      %c0_20 = arith.constant 0 : index
      %31 = vector.load %arg12[%30, %c0_20] : memref<160x256xf32, #tpu.memory_space<vmem>>, vector<32x256xf32>
      %32 = arith.truncf %29 : vector<8x256xf32> to vector<8x256xbf16>
      %33 = arith.truncf %27 : vector<8x128xf32> to vector<8x128xbf16>
      %cst_21 = arith.constant dense<0.000000e+00> : vector<256x128xf32>
      %34 = tpu.matmul %32, %33, %cst_21 {dimension_numbers = #tpu.dot_dimension_numbers<[0], [0], [1], [1], [0, 1, 1, 1], [], []>} : vector<8x256xbf16>, vector<8x128xbf16>, vector<256x128xf32> -> vector<256x128xf32>
      %cst_22 = arith.constant dense<0xFF800000> : vector<128xf32>
      %35 = vector.multi_reduction <maximumf>, %34, %cst_22 [0] : vector<256x128xf32> to vector<128xf32>
      %36 = vector.shape_cast %35 : vector<128xf32> to vector<1x128xf32>
      %37 = vector.broadcast %36 : vector<1x128xf32> to vector<256x128xf32>
      %38 = arith.subf %34, %37 : vector<256x128xf32>
      %39 = math.exp %38 : vector<256x128xf32>
      %cst_23 = arith.constant dense<0.000000e+00> : vector<128xf32>
      %40 = vector.multi_reduction <add>, %39, %cst_23 [0] : vector<256x128xf32> to vector<128xf32>
      %41 = vector.shape_cast %40 : vector<128xf32> to vector<1x128xf32>
      %42 = arith.truncf %31 : vector<32x256xf32> to vector<32x256xbf16>
      %43 = arith.truncf %39 : vector<256x128xf32> to vector<256x128xbf16>
      %cst_24 = arith.constant dense<0.000000e+00> : vector<32x128xf32>
      %44 = tpu.matmul %42, %43, %cst_24 {dimension_numbers = #tpu.dot_dimension_numbers<[1], [0], [0], [1], [0, 0, 1, 1], [], []>} : vector<32x256xbf16>, vector<256x128xbf16>, vector<32x128xf32> -> vector<32x128xf32>
      %45 = arith.index_cast %arg14 : i32 to index
      %46 = memref.load %arg8[%45] : memref<4xf32, #tpu.memory_space<smem>>
      %47 = tpu.reciprocal %41 {approx = true} : vector<1x128xf32> -> vector<1x128xf32>
      %48 = vector.broadcast %46 : f32 to vector<1x128xf32>
      %49 = arith.mulf %48, %47 : vector<1x128xf32>
      %50 = vector.broadcast %49 : vector<1x128xf32> to vector<32x128xf32>
      %51 = arith.mulf %50, %44 : vector<32x128xf32>
      %52 = arith.addf %51, %4 : vector<32x128xf32>
      %53 = arith.index_cast %arg14 : i32 to index
      %c0_25 = arith.constant 0 : index
      %c0_26 = arith.constant 0 : index
      %54 = vector.load %arg9[%53, %c0_25, %c0_26] : memref<4x32x32xf32, #tpu.memory_space<vmem>>, vector<1x32x32xf32>
      %55 = vector.shape_cast %54 : vector<1x32x32xf32> to vector<32x32xf32>
      %cst_27 = arith.constant dense<0.000000e+00> : vector<32x128xf32>
      %56 = tpu.matmul %55, %52, %cst_27 {dimension_numbers = #tpu.dot_dimension_numbers<[1], [0], [0], [1], [0, 0, 1, 1], [], []>} : vector<32x32xf32>, vector<32x128xf32>, vector<32x128xf32> -> vector<32x128xf32>
      %57 = arith.addf %arg15, %56 : vector<32x128xf32>
      scf.yield %57 : vector<32x128xf32>
    }
    %c4_i32_12 = arith.constant 4 : i32
    %c0_13 = arith.constant 0 : index
    %c0_14 = arith.constant 0 : index
    %c0_15 = arith.constant 0 : index
    %16 = vector.load %arg11[%c0_13, %c0_14, %c0_15] : memref<1x32x128xf32, #tpu.memory_space<vmem>>, vector<1x32x128xf32>
    %17 = vector.shape_cast %16 : vector<1x32x128xf32> to vector<32x128xf32>
    %18 = vector.shape_cast %15 : vector<32x128xf32> to vector<1x32x128xf32>
    tpu.vector_store %arg11[%c0_13, %c0_14, %c0_15], %18 {strides = array<i32>} : memref<1x32x128xf32, #tpu.memory_space<vmem>>, vector<1x32x128xf32>,
    return
  }
  func.func @transform_0(%arg0: i32, %arg1: i32) -> (i32, i32, i32) {
    %c0_i32 = arith.constant 0 : i32
    %c0_i32_0 = arith.constant 0 : i32
    %c0_i32_1 = arith.constant 0 : i32
    return %arg0, %c0_i32, %c0_i32_0 : i32, i32, i32
  }
  func.func @transform_1(%arg0: i32, %arg1: i32) -> (i32, i32, i32) {
    %c0_i32 = arith.constant 0 : i32
    %c0_i32_0 = arith.constant 0 : i32
    return %arg0, %c0_i32, %arg1 : i32, i32, i32
  }
  func.func @transform_2(%arg0: i32, %arg1: i32) -> (i32, i32) {
    %c0_i32 = arith.constant 0 : i32
    %c0_i32_0 = arith.constant 0 : i32
    %c0_i32_1 = arith.constant 0 : i32
    return %c0_i32, %c0_i32_0 : i32, i32
  }
  func.func @transform_3(%arg0: i32, %arg1: i32) -> (i32, i32) {
    %c0_i32 = arith.constant 0 : i32
    %c0_i32_0 = arith.constant 0 : i32
    %c0_i32_1 = arith.constant 0 : i32
    return %c0_i32, %c0_i32_0 : i32, i32
  }
  func.func @transform_4(%arg0: i32, %arg1: i32) -> (i32, i32) {
    %c0_i32 = arith.constant 0 : i32
    %c0_i32_0 = arith.constant 0 : i32
    %c0_i32_1 = arith.constant 0 : i32
    return %c0_i32, %c0_i32_0 : i32, i32
  }
  func.func @transform_5(%arg0: i32, %arg1: i32) -> (i32, i32) {
    %c0_i32 = arith.constant 0 : i32
    %c0_i32_0 = arith.constant 0 : i32
    %c0_i32_1 = arith.constant 0 : i32
    return %c0_i32, %c0_i32_0 : i32, i32
  }
  func.func @transform_6(%arg0: i32, %arg1: i32) -> i32 {
    %c0_i32 = arith.constant 0 : i32
    %c0_i32_0 = arith.constant 0 : i32
    return %c0_i32 : i32
  }
  func.func @transform_7(%arg0: i32, %arg1: i32) -> (i32, i32, i32) {
    %c0_i32 = arith.constant 0 : i32
    %c0_i32_0 = arith.constant 0 : i32
    %c0_i32_1 = arith.constant 0 : i32
    %c0_i32_2 = arith.constant 0 : i32
    return %c0_i32, %c0_i32_0, %c0_i32_1 : i32, i32, i32
  }
  func.func @transform_8(%arg0: i32, %arg1: i32) -> (i32, i32) {
    %c0_i32 = arith.constant 0 : i32
    %c0_i32_0 = arith.constant 0 : i32
    %c0_i32_1 = arith.constant 0 : i32
    return %c0_i32, %c0_i32_0 : i32, i32
  }
  func.func @transform_9(%arg0: i32, %arg1: i32) -> (i32, i32, i32) {
    %c0_i32 = arith.constant 0 : i32
    %c0_i32_0 = arith.constant 0 : i32
    return %arg0, %c0_i32, %arg1 : i32, i32, i32
  }
}

</mosaic_0001>

<llo_original>
// kernel: tpu_custom_call.1
$region0: #{tpu_custom_call.1}
  #allocation0 [shape = 'u32[]', space=smem, size = 0x4, offset = 0x4, fixed_abs, tag = 'smem constant byte address 0x4 - core index']
  #allocation1 [shape = 'u32[144,128]{1,0:T(1,128)}', space=vmem, size = 0x12000, scoped, tag = 'internal scratch']
  #allocation2 [shape = 'f32[160,256]{1,0:T(8,128)}', space=vmem, size = 0x28000, scoped, tag = 'scratch operand']
  #allocation3 [shape = 'f32[32,128]{1,0:T(8,128)}', space=vmem, size = 0x4000, scoped, tag = 'scratch operand']
  %s0 = inlined_call_operand.vmem [shape: f32[2,32,256], index: 0, kind: input, shape index: {}]
  %s1 = inlined_call_operand.vmem [shape: f32[2,32,256], index: 1, kind: input, shape index: {}]
  %s2 = inlined_call_operand.vmem [shape: f32[160,32], index: 2, kind: input, shape index: {}]
  %s3 = inlined_call_operand.vmem [shape: f32[160,1], index: 3, kind: input, shape index: {}]
  %s4 = inlined_call_operand.hbm [shape: f32[32,32], index: 4, kind: input, shape index: {}]
  %s5 = inlined_call_operand.vmem [shape: f32[32,1], index: 5, kind: input, shape index: {}]
  %s6 = inlined_call_operand.vmem [shape: f32[4], index: 6, kind: input, shape index: {}]
  %s7 = inlined_call_operand.vmem [shape: f32[4,32,32], index: 7, kind: input, shape index: {}]
  %s8 = inlined_call_operand.vmem [shape: f32[32,1], index: 8, kind: input, shape index: {}]
  %s9 = inlined_call_operand.hbm [shape: f32[2,32,256], index: 9, kind: output, shape index: {}]
  %s10 = sld [smem:[#allocation0]]
  $region126: #{tpu_custom_call.1} parent=0
    _
  %s12 = ssub.s32 1, %s10
  %s13 = scalar_select 0, %s12, %s10
  $region1: #{tpu_custom_call.1} parent=0
    #allocation4 [shape = 'u8[32768]{0}', space=vmem, size = 0x8000, scoped, tag = 'input window, operand 1']
    #allocation5 [shape = 'u8[16384]{0}', space=vmem, size = 0x4000, scoped, tag = 'input window, operand 4, single buffered']
    #allocation6 [shape = 's32[2]{0}', space=sflag, size = 0x8, scoped, tag = 'scoped memory for tpu_custom_call.1']
    #allocation7 [shape = 's32[2]{0}', space=sflag, size = 0x8, scoped, tag = 'scoped memory for tpu_custom_call.1']
    #allocation8 [shape = 's32[2]{0}', space=sflag, size = 0x8, scoped, tag = 'scoped memory for tpu_custom_call.1']
    #allocation9 [shape = 'u8[512]{0}', space=smem, size = 0x200, scoped, tag = 'input window, operand 6, single buffered']
    #allocation10 [shape = 'u8[32768]{0}', space=vmem, size = 0x8000, scoped, tag = 'output window, operand 0']
    %14 = vsyncpa [#allocation6], 0
    %15 = vsyncpa [#allocation8], 0
    %16 = vsyncpa [#allocation7], 0
    %s17 = scalar_lea.sflag [#allocation7], 1
    %18 = vsyncpa %s17, 0
    loop: start=0, step=1, limit=6
    $region2: #{tpu_custom_call.1} parent=1 // loop_pre_header
      _
    $region3: #{tpu_custom_call.1} parent=1 // loop_header
      %s20 = sphi 0, %s24
      %p21 = scmp.ge.s32.totalorder %s20, 6
      %s27 = sphi 0, %s39
      %s28 = sphi 0, %s35
      %s29 = sphi 0, %s27
      %s30 = sphi 0, %s28
      %s31 = sphi 0, %s29
      %s32 = sphi 0, %s30
      %s42 = sphi 0, %s44
      %s45 = sphi 0, %s42
      %s46 = sphi 0, %s45
      %s62 = sphi 0, %s46
      %s70 = sphi 0, %s72
      %s73 = sphi 0, %s70
      %s74 = sphi 0, %s73
      %s90 = sphi 0, %s74
      %s94 = sphi 0, %s94
      %s96 = sphi 0, %s94
      %s97 = sphi 0, %s96
      %s111 = sphi 0, %s97
      %s115 = sphi 0, %s115
      %s117 = sphi 0, %s115
      %s118 = sphi 0, %s117
      %s132 = sphi 0, %s118
      %s136 = sphi 0, %s136
      %s138 = sphi 0, %s136
      %s139 = sphi 0, %s138
      %s153 = sphi 0, %s139
      %s157 = sphi 0, %s157
      %s159 = sphi 0, %s157
      %s160 = sphi 0, %s159
      %s174 = sphi 0, %s160
      %s178 = sphi 0, %s178
      %s180 = sphi 0, %s178
      %s181 = sphi 0, %s180
      %s195 = sphi 0, %s181
      %s199 = sphi 0, %s199
      %s201 = sphi 0, %s199
      %s202 = sphi 0, %s201
      %s216 = sphi 0, %s202
      %s220 = sphi 0, %s220
      %s222 = sphi 0, %s220
      %s223 = sphi 0, %s222
      %s237 = sphi 0, %s223
      %s245 = sphi 0, %s247
      %s248 = sphi 0, %s245
      %s249 = sphi 0, %s248
      %s265 = sphi 0, %s249
    $region4: #{tpu_custom_call.1} parent=1 // loop_header_branch
      %23 = sbr.rel (%p21) target = $region8
    $region5: #{tpu_custom_call.1} parent=1 // loop_body
      %s25 = ssub.s32 %s20, 1
      %s26 = ssub.s32 %s20, 2
      %s33 = sadd.s32 1, %s28
      %p34 = scmp.ge.s32.totalorder %s33, 2
      %s35 = scalar_select %p34, 0, %s33
      %s36 = sadd.s32 1, %s27
      %s37 = scalar_select %p34, %s36, %s27
      %p38 = scmp.ge.s32.totalorder %s37, 2
      %s39 = scalar_select %p38, 0, %s37
      %s40 = ssub.s32 %s27, %s39
      %p41 = scmp.eq.s32.totalorder %s40, 0
      %s43 = sadd.s32 %s42, 1
      %s44 = scalar_select %p41, %s42, %s43
      %p47 = pneg %p41
      %p48 = scmp.eq.s32.totalorder %s20, 3
      %p49 = por %p47, %p48
      %p50 = scmp.ne.s32.totalorder %s42, %s45
      %p51 = scmp.eq.s32.totalorder %s20, 0
      %p52 = por %p50, %p51
      %p53 = scmp.ne.s32.totalorder %s42, %s45
      %p54 = scmp.eq.s32.totalorder %s25, 3
      %p55 = por %p53, %p54
      %p56 = scmp.ne.s32.totalorder %s45, %s46
      %p57 = scmp.eq.s32.totalorder %s25, 0
      %p58 = por %p56, %p57
      %p59 = scmp.ne.s32.totalorder %s45, %s46
      %p60 = scmp.eq.s32.totalorder %s26, 3
      %p61 = por %p59, %p60
      %p63 = scmp.ne.s32.totalorder %s46, %s62
      %p64 = scmp.eq.s32.totalorder %s26, 0
      %p65 = por %p63, %p64
      %s66 = ssub.s32 %s27, %s39
      %s67 = ssub.s32 %s28, %s35
      %s68 = sor.u32 %s66, %s67
      %p69 = scmp.eq.s32.totalorder %s68, 0
      %s71 = sadd.s32 %s70, 1
      %s72 = scalar_select %p69, %s70, %s71
      %p75 = pneg %p69
      %p76 = scmp.eq.s32.totalorder %s20, 3
      %p77 = por %p75, %p76
      %p78 = scmp.ne.s32.totalorder %s70, %s73
      %p79 = scmp.eq.s32.totalorder %s20, 0
      %p80 = por %p78, %p79
      %p81 = scmp.ne.s32.totalorder %s70, %s73
      %p82 = scmp.eq.s32.totalorder %s25, 3
      %p83 = por %p81, %p82
      %p84 = scmp.ne.s32.totalorder %s73, %s74
      %p85 = scmp.eq.s32.totalorder %s25, 0
      %p86 = por %p84, %p85
      %p87 = scmp.ne.s32.totalorder %s73, %s74
      %p88 = scmp.eq.s32.totalorder %s26, 3
      %p89 = por %p87, %p88
      %p91 = scmp.ne.s32.totalorder %s74, %s90
      %p92 = scmp.eq.s32.totalorder %s26, 0
      %p93 = por %p91, %p92
      %s95 = sadd.s32 %s94, 1
      %p98 = scmp.eq.s32.totalorder %s20, 3
      %p99 = scmp.ne.s32.totalorder %s94, %s96
      %p100 = scmp.eq.s32.totalorder %s20, 0
      %p101 = por %p99, %p100
      %p102 = scmp.ne.s32.totalorder %s94, %s96
      %p103 = scmp.eq.s32.totalorder %s25, 3
      %p104 = por %p102, %p103
      %p105 = scmp.ne.s32.totalorder %s96, %s97
      %p106 = scmp.eq.s32.totalorder %s25, 0
      %p107 = por %p105, %p106
      %p108 = scmp.ne.s32.totalorder %s96, %s97
      %p109 = scmp.eq.s32.totalorder %s26, 3
      %p110 = por %p108, %p109
      %p112 = scmp.ne.s32.totalorder %s97, %s111
      %p113 = scmp.eq.s32.totalorder %s26, 0
      %p114 = por %p112, %p113
      %s116 = sadd.s32 %s115, 1
      %p119 = scmp.eq.s32.totalorder %s20, 3
      %p120 = scmp.ne.s32.totalorder %s115, %s117
      %p121 = scmp.eq.s32.totalorder %s20, 0
      %p122 = por %p120, %p121
      %p123 = scmp.ne.s32.totalorder %s115, %s117
      %p124 = scmp.eq.s32.totalorder %s25, 3
      %p125 = por %p123, %p124
      %p126 = scmp.ne.s32.totalorder %s117, %s118
      %p127 = scmp.eq.s32.totalorder %s25, 0
      %p128 = por %p126, %p127
      %p129 = scmp.ne.s32.totalorder %s117, %s118
      %p130 = scmp.eq.s32.totalorder %s26, 3
      %p131 = por %p129, %p130
      %p133 = scmp.ne.s32.totalorder %s118, %s132
      %p134 = scmp.eq.s32.totalorder %s26, 0
      %p135 = por %p133, %p134
      %s137 = sadd.s32 %s136, 1
      %p140 = scmp.eq.s32.totalorder %s20, 3
      %p141 = scmp.ne.s32.totalorder %s136, %s138
      %p142 = scmp.eq.s32.totalorder %s20, 0
      %p143 = por %p141, %p142
      %p144 = scmp.ne.s32.totalorder %s136, %s138
      %p145 = scmp.eq.s32.totalorder %s25, 3
      %p146 = por %p144, %p145
      %p147 = scmp.ne.s32.totalorder %s138, %s139
      %p148 = scmp.eq.s32.totalorder %s25, 0
      %p149 = por %p147, %p148
      %p150 = scmp.ne.s32.totalorder %s138, %s139
      %p151 = scmp.eq.s32.totalorder %s26, 3
      %p152 = por %p150, %p151
      %p154 = scmp.ne.s32.totalorder %s139, %s153
      %p155 = scmp.eq.s32.totalorder %s26, 0
      %p156 = por %p154, %p155
      %s158 = sadd.s32 %s157, 1
      %p161 = scmp.eq.s32.totalorder %s20, 3
      %p162 = scmp.ne.s32.totalorder %s157, %s159
      %p163 = scmp.eq.s32.totalorder %s20, 0
      %p164 = por %p162, %p163
      %p165 = scmp.ne.s32.totalorder %s157, %s159
      %p166 = scmp.eq.s32.totalorder %s25, 3
      %p167 = por %p165, %p166
      %p168 = scmp.ne.s32.totalorder %s159, %s160
      %p169 = scmp.eq.s32.totalorder %s25, 0
      %p170 = por %p168, %p169
      %p171 = scmp.ne.s32.totalorder %s159, %s160
      %p172 = scmp.eq.s32.totalorder %s26, 3
      %p173 = por %p171, %p172
      %p175 = scmp.ne.s32.totalorder %s160, %s174
      %p176 = scmp.eq.s32.totalorder %s26, 0
      %p177 = por %p175, %p176
      %s179 = sadd.s32 %s178, 1
      %p182 = scmp.eq.s32.totalorder %s20, 3
      %p183 = scmp.ne.s32.totalorder %s178, %s180
      %p184 = scmp.eq.s32.totalorder %s20, 0
      %p185 = por %p183, %p184
      %p186 = scmp.ne.s32.totalorder %s178, %s180
      %p187 = scmp.eq.s32.totalorder %s25, 3
      %p188 = por %p186, %p187
      %p189 = scmp.ne.s32.totalorder %s180, %s181
      %p190 = scmp.eq.s32.totalorder %s25, 0
      %p191 = por %p189, %p190
      %p192 = scmp.ne.s32.totalorder %s180, %s181
      %p193 = scmp.eq.s32.totalorder %s26, 3
      %p194 = por %p192, %p193
      %p196 = scmp.ne.s32.totalorder %s181, %s195
      %p197 = scmp.eq.s32.totalorder %s26, 0
      %p198 = por %p196, %p197
      %s200 = sadd.s32 %s199, 1
      %p203 = scmp.eq.s32.totalorder %s20, 3
      %p204 = scmp.ne.s32.totalorder %s199, %s201
      %p205 = scmp.eq.s32.totalorder %s20, 0
      %p206 = por %p204, %p205
      %p207 = scmp.ne.s32.totalorder %s199, %s201
      %p208 = scmp.eq.s32.totalorder %s25, 3
      %p209 = por %p207, %p208
      %p210 = scmp.ne.s32.totalorder %s201, %s202
      %p211 = scmp.eq.s32.totalorder %s25, 0
      %p212 = por %p210, %p211
      %p213 = scmp.ne.s32.totalorder %s201, %s202
      %p214 = scmp.eq.s32.totalorder %s26, 3
      %p215 = por %p213, %p214
      %p217 = scmp.ne.s32.totalorder %s202, %s216
      %p218 = scmp.eq.s32.totalorder %s26, 0
      %p219 = por %p217, %p218
      %s221 = sadd.s32 %s220, 1
      %p224 = scmp.eq.s32.totalorder %s20, 3
      %p225 = scmp.ne.s32.totalorder %s220, %s222
      %p226 = scmp.eq.s32.totalorder %s20, 0
      %p227 = por %p225, %p226
      %p228 = scmp.ne.s32.totalorder %s220, %s222
      %p229 = scmp.eq.s32.totalorder %s25, 3
      %p230 = por %p228, %p229
      %p231 = scmp.ne.s32.totalorder %s222, %s223
      %p232 = scmp.eq.s32.totalorder %s25, 0
      %p233 = por %p231, %p232
      %p234 = scmp.ne.s32.totalorder %s222, %s223
      %p235 = scmp.eq.s32.totalorder %s26, 3
      %p236 = por %p234, %p235
      %p238 = scmp.ne.s32.totalorder %s223, %s237
      %p239 = scmp.eq.s32.totalorder %s26, 0
      %p240 = por %p238, %p239
      %s241 = ssub.s32 %s27, %s39
      %s242 = ssub.s32 %s28, %s35
      %s243 = sor.u32 %s241, %s242
      %p244 = scmp.eq.s32.totalorder %s243, 0
      %s246 = sadd.s32 %s245, 1
      %s247 = scalar_select %p244, %s245, %s246
      %p250 = pneg %p244
      %p251 = scmp.eq.s32.totalorder %s20, 3
      %p252 = por %p250, %p251
      %p253 = scmp.ne.s32.totalorder %s245, %s248
      %p254 = scmp.eq.s32.totalorder %s20, 0
      %p255 = por %p253, %p254
      %p256 = scmp.ne.s32.totalorder %s245, %s248
      %p257 = scmp.eq.s32.totalorder %s25, 3
      %p258 = por %p256, %p257
      %p259 = scmp.ne.s32.totalorder %s248, %s249
      %p260 = scmp.eq.s32.totalorder %s25, 0
      %p261 = por %p259, %p260
      %p262 = scmp.ne.s32.totalorder %s248, %s249
      %p263 = scmp.eq.s32.totalorder %s26, 3
      %p264 = por %p262, %p263
      %p266 = scmp.ne.s32.totalorder %s249, %s265
      %p267 = scmp.eq.s32.totalorder %s26, 0
      %p268 = por %p266, %p267
      %p269 = scmp.le.s32.totalorder 1, %s20
      %p270 = scmp.lt.s32.totalorder %s20, 5
      %p271 = pnand %p269, %p270
      %p272 = pneg %p271
      // Predicated region
      $region9: #{tpu_custom_call.1} parent=5 // pred_check
        _
      $region10: #{tpu_custom_call.1} parent=5 // pred_check_branch
        %274 = sbr.rel (%p271) target = $region12
      $region11: #{tpu_custom_call.1} parent=5 // pred_region
        %s275 = ssub.s32 %s20, 1
        // Predicated region
        $region13: #{tpu_custom_call.1} parent=11 // pred_check
          %p276 = pneg %p107
        $region14: #{tpu_custom_call.1} parent=11 // pred_check_branch
          %278 = sbr.rel (%p276) target = $region16
        $region15: #{tpu_custom_call.1} parent=11 // pred_region
          _
        $region16: #{tpu_custom_call.1} parent=11 // pred_fallthru
          _
        // Predicated region
        $region17: #{tpu_custom_call.1} parent=11 // pred_check
          %p279 = pneg %p128
        $region18: #{tpu_custom_call.1} parent=11 // pred_check_branch
          %281 = sbr.rel (%p279) target = $region20
        $region19: #{tpu_custom_call.1} parent=11 // pred_region
          _
        $region20: #{tpu_custom_call.1} parent=11 // pred_fallthru
          _
        // Predicated region
        $region21: #{tpu_custom_call.1} parent=11 // pred_check
          %p282 = pneg %p149
        $region22: #{tpu_custom_call.1} parent=11 // pred_check_branch
          %284 = sbr.rel (%p282) target = $region24
        $region23: #{tpu_custom_call.1} parent=11 // pred_region
          %s286 = ssub.s32 512, 512
          %287 = vsyncadd [#allocation6], %s286
          %s288 = sshll.u32 [#allocation5], 4
          %s289 = int_to_ptr.vmem [resolvable:$true] %s288
          %294 = dma.hbm_to_vmem [thread:$0]  %s4, 512, %s289, [#allocation6], 128, 128, 8
        $region24: #{tpu_custom_call.1} parent=11 // pred_fallthru
          _
        // Predicated region
        $region25: #{tpu_custom_call.1} parent=11 // pred_check
          %p295 = pneg %p170
        $region26: #{tpu_custom_call.1} parent=11 // pred_check_branch
          %297 = sbr.rel (%p295) target = $region28
        $region27: #{tpu_custom_call.1} parent=11 // pred_region
          _
        $region28: #{tpu_custom_call.1} parent=11 // pred_fallthru
          _
        // Predicated region
        $region29: #{tpu_custom_call.1} parent=11 // pred_check
          %p298 = pneg %p191
        $region30: #{tpu_custom_call.1} parent=11 // pred_check_branch
          %300 = sbr.rel (%p298) target = $region32
        $region31: #{tpu_custom_call.1} parent=11 // pred_region
          %s302 = ssub.s32 16, 16
          %303 = vsyncadd [#allocation8], %s302
          %s305 = sshll.u32 %s6, 4
          %s306 = int_to_ptr.vmem [resolvable:$true] %s305
          %308 = dma.vmem_to_smem %s306, 16, [#allocation9], [#allocation8]
        $region32: #{tpu_custom_call.1} parent=11 // pred_fallthru
          _
        // Predicated region
        $region33: #{tpu_custom_call.1} parent=11 // pred_check
          %p309 = pneg %p212
        $region34: #{tpu_custom_call.1} parent=11 // pred_check_branch
          %311 = sbr.rel (%p309) target = $region36
        $region35: #{tpu_custom_call.1} parent=11 // pred_region
          _
        $region36: #{tpu_custom_call.1} parent=11 // pred_fallthru
          _
        // Predicated region
        $region37: #{tpu_custom_call.1} parent=11 // pred_check
          %p312 = pneg %p233
        $region38: #{tpu_custom_call.1} parent=11 // pred_check_branch
          %314 = sbr.rel (%p312) target = $region40
        $region39: #{tpu_custom_call.1} parent=11 // pred_region
          _
        $region40: #{tpu_custom_call.1} parent=11 // pred_fallthru
          _
      $region12: #{tpu_custom_call.1} parent=5 // pred_fallthru
        _
      %p315 = scmp.lt.s32.totalorder %s20, 4
      // Predicated region
      $region41: #{tpu_custom_call.1} parent=5 // pred_check
        %p316 = pneg %p315
      $region42: #{tpu_custom_call.1} parent=5 // pred_check_branch
        %318 = sbr.rel (%p316) target = $region44
      $region43: #{tpu_custom_call.1} parent=5 // pred_region
        // Predicated region
        $region45: #{tpu_custom_call.1} parent=43 // pred_check
          %p319 = pneg %p52
        $region46: #{tpu_custom_call.1} parent=43 // pred_check_branch
          %321 = sbr.rel (%p319) target = $region48
        $region47: #{tpu_custom_call.1} parent=43 // pred_region
          %p322 = scmp.lt.s32.totalorder %s27, 1
          %s323 = scalar_select %p322, %s27, 1
          %s324 = smul.addr %s323, 8
          %s325 = smul.addr %s324, 8
          %s326 = scalar_lea.vmem %s0, %s325
        $region48: #{tpu_custom_call.1} parent=43 // pred_fallthru
          _
        // Predicated region
        $region49: #{tpu_custom_call.1} parent=43 // pred_check
          %p327 = pneg %p80
        $region50: #{tpu_custom_call.1} parent=43 // pred_check_branch
          %329 = sbr.rel (%p327) target = $region52
        $region51: #{tpu_custom_call.1} parent=43 // pred_region
          %s330 = sand.u32 %s70, 1
          %s331 = sand.u32 %s70, 1
          %s332 = smul.addr %s331, 32
          %s333 = scalar_lea.vmem [#allocation4], %s332
          %s334 = smul.addr %s27, 8
          %s335 = sadd.s32 %s28, %s334
          %s336 = smul.addr %s335, 8
          %s337 = scalar_lea.vmem %s1, %s336
          // Predicated region
          $region53: #{tpu_custom_call.1} parent=51 // pred_check
            _
          $region54: #{tpu_custom_call.1} parent=51 // pred_check_branch
            %339 = sbr.rel (0) target = $region56
          $region55: #{tpu_custom_call.1} parent=51 // pred_region
            // Predicated region
            $region57: #{tpu_custom_call.1} parent=55 // pred_check
              _
            $region58: #{tpu_custom_call.1} parent=55 // pred_check_branch
              %341 = sbr.rel (0) target = $region60
            $region59: #{tpu_custom_call.1} parent=55 // pred_region
              // Predicated region
              $region72: #{tpu_custom_call.1} parent=59 // pred_check
                _
              $region73: #{tpu_custom_call.1} parent=59 // pred_check_branch
                %362 = sbr.rel (0) target = $region75
              $region74: #{tpu_custom_call.1} parent=59 // pred_region
                loop: start=0, step=1, limit=1
                $region76: #{tpu_custom_call.1} parent=74 // loop_pre_header
                  _
                $region77: #{tpu_custom_call.1} parent=74 // loop_header
                  %s364 = sphi 0, %s368
                  %p365 = scmp.ge.s32.totalorder %s364, 1
                  %s369 = sphi %s337, %s337
                  %s370 = sphi %s333, %s333
                $region78: #{tpu_custom_call.1} parent=74 // loop_header_branch
                  %367 = sbr.rel (%p365) target = $region82
                $region79: #{tpu_custom_call.1} parent=74 // loop_body
                  %v371 = vld [vmem:[%s369] sm:$0xff]
                  %372 = vst [vmem:[%s370] sm:$0xff] %v371
                  %v373 = vld [vmem:[%s369 + $0x10] sm:$0xff]
                  %374 = vst [vmem:[%s370 + $0x8] sm:$0xff] %v373
                  %v375 = vld [vmem:[%s369 + $0x20] sm:$0xff]
                  %376 = vst [vmem:[%s370 + $0x10] sm:$0xff] %v375
                  %v377 = vld [vmem:[%s369 + $0x30] sm:$0xff]
                  %378 = vst [vmem:[%s370 + $0x18] sm:$0xff] %v377
                $region80: #{tpu_custom_call.1} parent=74 // loop_footer
                  %s368 = sadd.s32 1, %s364
                $region81: #{tpu_custom_call.1} parent=74 // loop_footer_branch
                  %363 = sbr.rel target = $region77
                $region82: #{tpu_custom_call.1} parent=74 // loop_exit
                  _
              $region75: #{tpu_custom_call.1} parent=59 // pred_fallthru
                _
              // Predicated region
              $region83: #{tpu_custom_call.1} parent=59 // pred_check
                _
              $region84: #{tpu_custom_call.1} parent=59 // pred_check_branch
                %380 = sbr.rel target = $region86
              $region85: #{tpu_custom_call.1} parent=59 // pred_region
                _
              $region86: #{tpu_custom_call.1} parent=59 // pred_fallthru
                _
            $region60: #{tpu_custom_call.1} parent=55 // pred_fallthru
              _
            // Predicated region
            $region61: #{tpu_custom_call.1} parent=55 // pred_check
              _
            $region62: #{tpu_custom_call.1} parent=55 // pred_check_branch
              %343 = sbr.rel target = $region64
            $region63: #{tpu_custom_call.1} parent=55 // pred_region
              loop: start=0, step=1, limit=1
              $region65: #{tpu_custom_call.1} parent=63 // loop_pre_header
                _
              $region66: #{tpu_custom_call.1} parent=63 // loop_header
                %s346 = sphi 0, %s350
                %p347 = scmp.ge.s32.totalorder %s346, 1
                %s351 = sphi %s337, %s337
                %s352 = sphi %s333, %s333
              $region67: #{tpu_custom_call.1} parent=63 // loop_header_branch
                %349 = sbr.rel (%p347) target = $region71
              $region68: #{tpu_custom_call.1} parent=63 // loop_body
                %v353 = vld [vmem:[%s351] sm:$0xff]
                %354 = vst [vmem:[%s352] sm:$0xff] %v353
                %v355 = vld [vmem:[%s351 + $0x10] sm:$0xff]
                %356 = vst [vmem:[%s352 + $0x8] sm:$0xff] %v355
                %v357 = vld [vmem:[%s351 + $0x20] sm:$0xff]
                %358 = vst [vmem:[%s352 + $0x10] sm:$0xff] %v357
                %v359 = vld [vmem:[%s351 + $0x30] sm:$0xff]
                %360 = vst [vmem:[%s352 + $0x18] sm:$0xff] %v359
              $region69: #{tpu_custom_call.1} parent=63 // loop_footer
                %s350 = sadd.s32 1, %s346
              $region70: #{tpu_custom_call.1} parent=63 // loop_footer_branch
                %345 = sbr.rel target = $region66
              $region71: #{tpu_custom_call.1} parent=63 // loop_exit
                _
            $region64: #{tpu_custom_call.1} parent=55 // pred_fallthru
              _
          $region56: #{tpu_custom_call.1} parent=51 // pred_fallthru
            _
          %381 = vnop
        $region52: #{tpu_custom_call.1} parent=43 // pred_fallthru
          _
      $region44: #{tpu_custom_call.1} parent=5 // pred_fallthru
        _
      %p382 = scmp.le.s32.totalorder 1, %s20
      %p383 = scmp.lt.s32.totalorder %s20, 5
      %p384 = pnand %p382, %p383
      %p385 = pneg %p384
      // Predicated region
      $region87: #{tpu_custom_call.1} parent=5 // pred_check
        _
      $region88: #{tpu_custom_call.1} parent=5 // pred_check_branch
        %387 = sbr.rel (%p384) target = $region90
      $region89: #{tpu_custom_call.1} parent=5 // pred_region
        %s388 = ssub.s32 %s20, 1
        %s389 = sand.u32 %s73, 1
        %s390 = sand.u32 %s73, 1
        %s391 = smul.addr %s390, 32
        %s392 = scalar_lea.vmem [#allocation4], %s391
        // Predicated region
        $region91: #{tpu_custom_call.1} parent=89 // pred_check
          %p393 = pneg %p86
        $region92: #{tpu_custom_call.1} parent=89 // pred_check_branch
          %395 = sbr.rel (%p393) target = $region94
        $region93: #{tpu_custom_call.1} parent=89 // pred_region
          _
        $region94: #{tpu_custom_call.1} parent=89 // pred_fallthru
          _
        // Predicated region
        $region95: #{tpu_custom_call.1} parent=89 // pred_check
          %p396 = pneg %p149
        $region96: #{tpu_custom_call.1} parent=89 // pred_check_branch
          %398 = sbr.rel (%p396) target = $region98
        $region97: #{tpu_custom_call.1} parent=89 // pred_region
          %399 = dma.done [#allocation6], 512
        $region98: #{tpu_custom_call.1} parent=89 // pred_fallthru
          _
        // Predicated region
        $region99: #{tpu_custom_call.1} parent=89 // pred_check
          %p400 = pneg %p191
        $region100: #{tpu_custom_call.1} parent=89 // pred_check_branch
          %402 = sbr.rel (%p400) target = $region102
        $region101: #{tpu_custom_call.1} parent=89 // pred_region
          %403 = dma.done [#allocation8], 16
        $region102: #{tpu_custom_call.1} parent=89 // pred_fallthru
          _
        %404 = sfence
        %p405 = scmp.lt.s32.totalorder %s29, 1
        %s406 = scalar_select %p405, %s29, 1
        %s407 = smul.addr %s406, 8
        %s408 = smul.addr %s407, 8
        %s409 = scalar_lea.vmem %s0, %s408
        %p410 = pneg %p58
        %p411 = pneg %p55
        %s412 = sand.u32 %s73, 1
        %s413 = sand.u32 %s73, 1
        %s414 = smul.addr %s413, 32
        %s415 = scalar_lea.vmem [#allocation4], %s414
        %p416 = pneg %p86
        %p417 = pneg %p83
        %p418 = pneg %p107
        %p419 = pneg %p104
        %p420 = pneg %p128
        %p421 = pneg %p125
        %p422 = pneg %p149
        %p423 = pneg %p146
        %p424 = pneg %p170
        %p425 = pneg %p167
        %p426 = pneg %p191
        %p427 = pneg %p188
        %p428 = pneg %p212
        %p429 = pneg %p209
        %p430 = pneg %p233
        %p431 = pneg %p230
        %p432 = pneg %p261
        %p433 = pneg %p258
        %s434 = sand.u32 %s248, 1
        %s435 = scalar_lea.sflag [#allocation7], %s434
        %s436 = sand.u32 %s248, 1
        %s437 = smul.addr %s436, 32
        %s438 = scalar_lea.vmem [#allocation10], %s437
        %p439 = scmp.lt.s32.totalorder %s29, 1
        %s440 = scalar_select %p439, %s29, 1
        %s441 = smul.addr %s440, 8
        %s442 = smul.addr %s441, 8
        %s443 = scalar_lea.vmem %s0, %s442
        %p445 = scmp.eq.s32.totalorder %s30, 0
        // Predicated region
        $region103: #{tpu_custom_call.1} parent=89 // pred_check
          %p446 = pneg %p445
        $region104: #{tpu_custom_call.1} parent=89 // pred_check_branch
          %448 = sbr.rel (%p446) target = $region106
        $region105: #{tpu_custom_call.1} parent=89 // pred_region
          %v449 = vld [vmem:[%s2] sm:$0xff]
          %v450 = vld [vmem:[%s2 + $0x8] sm:$0xff]
          %v451 = vld [vmem:[%s2 + $0x10] sm:$0xff]
          %v452 = vld [vmem:[%s2 + $0x18] sm:$0xff]
          %v453 = vld [vmem:[%s2 + $0x20] sm:$0xff]
          %v454 = vld [vmem:[%s2 + $0x28] sm:$0xff]
          %v455 = vld [vmem:[%s2 + $0x30] sm:$0xff]
          %v456 = vld [vmem:[%s2 + $0x38] sm:$0xff]
          %v457 = vld [vmem:[%s2 + $0x40] sm:$0xff]
          %v458 = vld [vmem:[%s2 + $0x48] sm:$0xff]
          %v459 = vld [vmem:[%s2 + $0x50] sm:$0xff]
          %v460 = vld [vmem:[%s2 + $0x58] sm:$0xff]
          %v461 = vld [vmem:[%s2 + $0x60] sm:$0xff]
          %v462 = vld [vmem:[%s2 + $0x68] sm:$0xff]
          %v463 = vld [vmem:[%s2 + $0x70] sm:$0xff]
          %v464 = vld [vmem:[%s2 + $0x78] sm:$0xff]
          %v465 = vld [vmem:[%s2 + $0x80] sm:$0xff]
          %v466 = vld [vmem:[%s2 + $0x88] sm:$0xff]
          %v467 = vld [vmem:[%s2 + $0x90] sm:$0xff]
          %v468 = vld [vmem:[%s2 + $0x98] sm:$0xff]
          %v469 = vld [vmem:[%s443] sm:$0xff]
          %v470 = vld [vmem:[%s443 + $0x8] sm:$0xff]
          %v471 = vld [vmem:[%s443 + $0x10] sm:$0xff]
          %v472 = vld [vmem:[%s443 + $0x18] sm:$0xff]
          %v473 = vld [vmem:[%s443 + $0x20] sm:$0xff]
          %v474 = vld [vmem:[%s443 + $0x28] sm:$0xff]
          %v475 = vld [vmem:[%s443 + $0x30] sm:$0xff]
          %v476 = vld [vmem:[%s443 + $0x38] sm:$0xff]
          %v477 = vld [vmem:[%s3] sm:$0xff]
          %v478 = vld [vmem:[%s3 + $0x8] sm:$0xff]
          %v479 = vld [vmem:[%s3 + $0x10] sm:$0xff]
          %v480 = vld [vmem:[%s3 + $0x18] sm:$0xff]
          %v481 = vld [vmem:[%s3 + $0x20] sm:$0xff]
          %v482 = vld [vmem:[%s3 + $0x28] sm:$0xff]
          %v483 = vld [vmem:[%s3 + $0x30] sm:$0xff]
          %v484 = vld [vmem:[%s3 + $0x38] sm:$0xff]
          %v485 = vld [vmem:[%s3 + $0x40] sm:$0xff]
          %v486 = vld [vmem:[%s3 + $0x48] sm:$0xff]
          %v487 = vld [vmem:[%s3 + $0x50] sm:$0xff]
          %v488 = vld [vmem:[%s3 + $0x58] sm:$0xff]
          %v489 = vld [vmem:[%s3 + $0x60] sm:$0xff]
          %v490 = vld [vmem:[%s3 + $0x68] sm:$0xff]
          %v491 = vld [vmem:[%s3 + $0x70] sm:$0xff]
          %v492 = vld [vmem:[%s3 + $0x78] sm:$0xff]
          %v493 = vld [vmem:[%s3 + $0x80] sm:$0xff]
          %v494 = vld [vmem:[%s3 + $0x88] sm:$0xff]
          %v495 = vld [vmem:[%s3 + $0x90] sm:$0xff]
          %v496 = vld [vmem:[%s3 + $0x98] sm:$0xff]
          %498 = vset.pattern.permute.xlu0 0
          %499 = vperm.xlu0 %498, %v477
          %v500 = vpop.permute.xlu0 %499
          %503 = vset.pattern.permute.xlu0 0
          %504 = vperm.xlu0 %503, %v478
          %v505 = vpop.permute.xlu0 %504
          %508 = vset.pattern.permute.xlu0 0
          %509 = vperm.xlu0 %508, %v479
          %v510 = vpop.permute.xlu0 %509
          %513 = vset.pattern.permute.xlu0 0
          %514 = vperm.xlu0 %513, %v480
          %v515 = vpop.permute.xlu0 %514
          %518 = vset.pattern.permute.xlu0 0
          %519 = vperm.xlu0 %518, %v481
          %v520 = vpop.permute.xlu0 %519
          %523 = vset.pattern.permute.xlu0 0
          %524 = vperm.xlu0 %523, %v482
          %v525 = vpop.permute.xlu0 %524
          %528 = vset.pattern.permute.xlu0 0
          %529 = vperm.xlu0 %528, %v483
          %v530 = vpop.permute.xlu0 %529
          %533 = vset.pattern.permute.xlu0 0
          %534 = vperm.xlu0 %533, %v484
          %v535 = vpop.permute.xlu0 %534
          %538 = vset.pattern.permute.xlu0 0
          %539 = vperm.xlu0 %538, %v485
          %v540 = vpop.permute.xlu0 %539
          %543 = vset.pattern.permute.xlu0 0
          %544 = vperm.xlu0 %543, %v486
          %v545 = vpop.permute.xlu0 %544
          %548 = vset.pattern.permute.xlu0 0
          %549 = vperm.xlu0 %548, %v487
          %v550 = vpop.permute.xlu0 %549
          %553 = vset.pattern.permute.xlu0 0
          %554 = vperm.xlu0 %553, %v488
          %v555 = vpop.permute.xlu0 %554
          %558 = vset.pattern.permute.xlu0 0
          %559 = vperm.xlu0 %558, %v489
          %v560 = vpop.permute.xlu0 %559
          %563 = vset.pattern.permute.xlu0 0
          %564 = vperm.xlu0 %563, %v490
          %v565 = vpop.permute.xlu0 %564
          %568 = vset.pattern.permute.xlu0 0
          %569 = vperm.xlu0 %568, %v491
          %v570 = vpop.permute.xlu0 %569
          %573 = vset.pattern.permute.xlu0 0
          %574 = vperm.xlu0 %573, %v492
          %v575 = vpop.permute.xlu0 %574
          %578 = vset.pattern.permute.xlu0 0
          %579 = vperm.xlu0 %578, %v493
          %v580 = vpop.permute.xlu0 %579
          %583 = vset.pattern.permute.xlu0 0
          %584 = vperm.xlu0 %583, %v494
          %v585 = vpop.permute.xlu0 %584
          %588 = vset.pattern.permute.xlu0 0
          %589 = vperm.xlu0 %588, %v495
          %v590 = vpop.permute.xlu0 %589
          %593 = vset.pattern.permute.xlu0 0
          %594 = vperm.xlu0 %593, %v496
          %v595 = vpop.permute.xlu0 %594
          %vm597 = vcmask 261120
          %v599 = vsel %vm597, %v449, 0
          %v602 = vsel %vm597, %v450, 0
          %v605 = vsel %vm597, %v451, 0
          %v608 = vsel %vm597, %v452, 0
          %v611 = vsel %vm597, %v453, 0
          %v614 = vsel %vm597, %v454, 0
          %v617 = vsel %vm597, %v455, 0
          %v620 = vsel %vm597, %v456, 0
          %v623 = vsel %vm597, %v457, 0
          %v626 = vsel %vm597, %v458, 0
          %v629 = vsel %vm597, %v459, 0
          %v632 = vsel %vm597, %v460, 0
          %v635 = vsel %vm597, %v461, 0
          %v638 = vsel %vm597, %v462, 0
          %v641 = vsel %vm597, %v463, 0
          %v644 = vsel %vm597, %v464, 0
          %v647 = vsel %vm597, %v465, 0
          %v650 = vsel %vm597, %v466, 0
          %v653 = vsel %vm597, %v467, 0
          %v656 = vsel %vm597, %v468, 0
          %658 = vmatprep.subr.mxu0 %v470
          %659 = vmatpush1.msra.mxu0 %v469
          %660 = vmatprep.subr.mxu0 %v472
          %661 = vmatpush1.msra.mxu0 %v471
          %662 = vmatprep.subr.mxu0 %v474
          %663 = vmatpush1.msra.mxu0 %v473
          %664 = vmatprep.subr.mxu0 %v476
          %665 = vmatpush1.msra.mxu0 %v475
          %666 = vmatprep.subr.mxu0 0.0
          %667 = vmatpush1.msra.mxu0 0.0
          %668 = vmatprep.subr.mxu0 0.0
          %669 = vmatpush1.msra.mxu0 0.0
          %670 = vmatprep.subr.mxu0 0.0
          %671 = vmatpush1.msra.mxu0 0.0
          %672 = vmatprep.subr.mxu0 0.0
          %673 = vmatpush1.msra.mxu0 0.0
          %674 = vmatprep.subr.mxu0 0.0
          %675 = vmatpush1.msra.mxu0 0.0
          %676 = vmatprep.subr.mxu0 0.0
          %677 = vmatpush1.msra.mxu0 0.0
          %678 = vmatprep.subr.mxu0 0.0
          %679 = vmatpush1.msra.mxu0 0.0
          %680 = vmatprep.subr.mxu0 0.0
          %681 = vmatpush1.msra.mxu0 0.0
          %682 = vmatprep.subr.mxu0 0.0
          %683 = vmatpush1.msra.mxu0 0.0
          %684 = vmatprep.subr.mxu0 0.0
          %685 = vmatpush1.msra.mxu0 0.0
          %686 = vmatprep.subr.mxu0 0.0
          %687 = vmatpush1.msra.mxu0 0.0
          %688 = vmatprep.subr.mxu0 0.0
          %689 = vmatpush1.msra.mxu0 0.0
          %690 = vmatprep.subr.mxu0 0.0
          %691 = vmatpush1.msra.mxu0 0.0
          %692 = vmatprep.subr.mxu0 0.0
          %693 = vmatpush1.msra.mxu0 0.0
          %694 = vmatprep.subr.mxu0 0.0
          %695 = vmatpush1.msra.mxu0 0.0
          %696 = vmatprep.subr.mxu0 0.0
          %697 = vmatpush1.msra.mxu0 0.0
          %698 = vmatprep.subr.mxu0 0.0
          %699 = vmatpush1.msra.mxu0 0.0
          %700 = vmatprep.subr.mxu0 0.0
          %701 = vmatpush1.msra.mxu0 0.0
          %702 = vmatprep.subr.mxu0 0.0
          %703 = vmatpush1.msra.mxu0 0.0
          %704 = vmatprep.subr.mxu0 0.0
          %705 = vmatpush1.msra.mxu0 0.0
          %706 = vmatprep.subr.mxu0 0.0
          %707 = vmatpush1.msra.mxu0 0.0
          %708 = vmatprep.subr.mxu0 0.0
          %709 = vmatpush1.msra.mxu0 0.0
          %710 = vmatprep.subr.mxu0 0.0
          %711 = vmatpush1.msra.mxu0 0.0
          %712 = vmatprep.subr.mxu0 0.0
          %713 = vmatpush1.msra.mxu0 0.0
          %714 = vmatprep.subr.mxu0 0.0
          %715 = vmatpush1.msra.mxu0 0.0
          %716 = vmatprep.subr.mxu0 0.0
          %717 = vmatpush1.msra.mxu0 0.0
          %718 = vmatprep.subr.mxu0 0.0
          %719 = vmatpush1.msra.mxu0 0.0
          %720 = vmatprep.subr.mxu0 0.0
          %721 = vmatpush1.msra.mxu0 0.0
          %722 = vmatprep.mubr.f32.mxu0 0.0
          %723 = vmatmul.mubr.f32.gmra.mrb[0].mxu0 %v599
          %v724 = vpop.f32.mrb[0].mxu0
          %v725 = vadd.f32 %v500, %v724
          %v726 = vpop.f32.mrb[0].mxu0
          %v727 = vadd.f32 %v500, %v726
          %728 = vmatprep.mubr.f32.mxu0 0.0
          %729 = vmatmul.mubr.f32.gmra.mrb[0].mxu0 %v602
          %v730 = vpop.f32.mrb[0].mxu0
          %v731 = vadd.f32 %v505, %v730
          %v732 = vpop.f32.mrb[0].mxu0
          %v733 = vadd.f32 %v505, %v732
          %734 = vmatprep.mubr.f32.mxu0 0.0
          %735 = vmatmul.mubr.f32.gmra.mrb[0].mxu0 %v605
          %v736 = vpop.f32.mrb[0].mxu0
          %v737 = vadd.f32 %v510, %v736
          %v738 = vpop.f32.mrb[0].mxu0
          %v739 = vadd.f32 %v510, %v738
          %740 = vmatprep.mubr.f32.mxu0 0.0
          %741 = vmatmul.mubr.f32.gmra.mrb[0].mxu0 %v608
          %v742 = vpop.f32.mrb[0].mxu0
          %v743 = vadd.f32 %v515, %v742
          %v744 = vpop.f32.mrb[0].mxu0
          %v745 = vadd.f32 %v515, %v744
          %746 = vmatprep.mubr.f32.mxu0 0.0
          %747 = vmatmul.mubr.f32.gmra.mrb[0].mxu0 %v611
          %v748 = vpop.f32.mrb[0].mxu0
          %v749 = vadd.f32 %v520, %v748
          %v750 = vpop.f32.mrb[0].mxu0
          %v751 = vadd.f32 %v520, %v750
          %752 = vmatprep.mubr.f32.mxu0 0.0
          %753 = vmatmul.mubr.f32.gmra.mrb[0].mxu0 %v614
          %v754 = vpop.f32.mrb[0].mxu0
          %v755 = vadd.f32 %v525, %v754
          %v756 = vpop.f32.mrb[0].mxu0
          %v757 = vadd.f32 %v525, %v756
          %758 = vmatprep.mubr.f32.mxu0 0.0
          %759 = vmatmul.mubr.f32.gmra.mrb[0].mxu0 %v617
          %v760 = vpop.f32.mrb[0].mxu0
          %v761 = vadd.f32 %v530, %v760
          %v762 = vpop.f32.mrb[0].mxu0
          %v763 = vadd.f32 %v530, %v762
          %764 = vmatprep.mubr.f32.mxu0 0.0
          %765 = vmatmul.mubr.f32.gmra.mrb[0].mxu0 %v620
          %v766 = vpop.f32.mrb[0].mxu0
          %v767 = vadd.f32 %v535, %v766
          %v768 = vpop.f32.mrb[0].mxu0
          %v769 = vadd.f32 %v535, %v768
          %770 = vmatprep.mubr.f32.mxu0 0.0
          %771 = vmatmul.mubr.f32.gmra.mrb[0].mxu0 %v623
          %v772 = vpop.f32.mrb[0].mxu0
          %v773 = vadd.f32 %v540, %v772
          %v774 = vpop.f32.mrb[0].mxu0
          %v775 = vadd.f32 %v540, %v774
          %776 = vmatprep.mubr.f32.mxu0 0.0
          %777 = vmatmul.mubr.f32.gmra.mrb[0].mxu0 %v626
          %v778 = vpop.f32.mrb[0].mxu0
          %v779 = vadd.f32 %v545, %v778
          %v780 = vpop.f32.mrb[0].mxu0
          %v781 = vadd.f32 %v545, %v780
          %782 = vmatprep.mubr.f32.mxu0 0.0
          %783 = vmatmul.mubr.f32.gmra.mrb[0].mxu0 %v629
          %v784 = vpop.f32.mrb[0].mxu0
          %v785 = vadd.f32 %v550, %v784
          %v786 = vpop.f32.mrb[0].mxu0
          %v787 = vadd.f32 %v550, %v786
          %788 = vmatprep.mubr.f32.mxu0 0.0
          %789 = vmatmul.mubr.f32.gmra.mrb[0].mxu0 %v632
          %v790 = vpop.f32.mrb[0].mxu0
          %v791 = vadd.f32 %v555, %v790
          %v792 = vpop.f32.mrb[0].mxu0
          %v793 = vadd.f32 %v555, %v792
          %794 = vmatprep.mubr.f32.mxu0 0.0
          %795 = vmatmul.mubr.f32.gmra.mrb[0].mxu0 %v635
          %v796 = vpop.f32.mrb[0].mxu0
          %v797 = vadd.f32 %v560, %v796
          %v798 = vpop.f32.mrb[0].mxu0
          %v799 = vadd.f32 %v560, %v798
          %800 = vmatprep.mubr.f32.mxu0 0.0
          %801 = vmatmul.mubr.f32.gmra.mrb[0].mxu0 %v638
          %v802 = vpop.f32.mrb[0].mxu0
          %v803 = vadd.f32 %v565, %v802
          %v804 = vpop.f32.mrb[0].mxu0
          %v805 = vadd.f32 %v565, %v804
          %806 = vmatprep.mubr.f32.mxu0 0.0
          %807 = vmatmul.mubr.f32.gmra.mrb[0].mxu0 %v641
          %v808 = vpop.f32.mrb[0].mxu0
          %v809 = vadd.f32 %v570, %v808
          %v810 = vpop.f32.mrb[0].mxu0
          %v811 = vadd.f32 %v570, %v810
          %812 = vmatprep.mubr.f32.mxu0 0.0
          %813 = vmatmul.mubr.f32.gmra.mrb[0].mxu0 %v644
          %v814 = vpop.f32.mrb[0].mxu0
          %v815 = vadd.f32 %v575, %v814
          %v816 = vpop.f32.mrb[0].mxu0
          %v817 = vadd.f32 %v575, %v816
          %818 = vmatprep.mubr.f32.mxu0 0.0
          %819 = vmatmul.mubr.f32.gmra.mrb[0].mxu0 %v647
          %v820 = vpop.f32.mrb[0].mxu0
          %v821 = vadd.f32 %v580, %v820
          %v822 = vpop.f32.mrb[0].mxu0
          %v823 = vadd.f32 %v580, %v822
          %824 = vmatprep.mubr.f32.mxu0 0.0
          %825 = vmatmul.mubr.f32.gmra.mrb[0].mxu0 %v650
          %v826 = vpop.f32.mrb[0].mxu0
          %v827 = vadd.f32 %v585, %v826
          %v828 = vpop.f32.mrb[0].mxu0
          %v829 = vadd.f32 %v585, %v828
          %830 = vmatprep.mubr.f32.mxu0 0.0
          %831 = vmatmul.mubr.f32.gmra.mrb[0].mxu0 %v653
          %v832 = vpop.f32.mrb[0].mxu0
          %v833 = vadd.f32 %v590, %v832
          %v834 = vpop.f32.mrb[0].mxu0
          %v835 = vadd.f32 %v590, %v834
          %836 = vmatprep.mubr.f32.mxu0 0.0
          %837 = vmatmul.mubr.f32.gmra.mrb[0].mxu0 %v656
          %v838 = vpop.f32.mrb[0].mxu0
          %v839 = vadd.f32 %v595, %v838
          %v840 = vpop.f32.mrb[0].mxu0
          %v841 = vadd.f32 %v595, %v840
          %842 = vdwg.mxu0
          %843 = vst [vmem:[#allocation2] sm:$0xff] %v725
          %844 = vst [vmem:[#allocation2 + $0x8] sm:$0xff] %v727
          %845 = vst [vmem:[#allocation2 + $0x10] sm:$0xff] %v731
          %846 = vst [vmem:[#allocation2 + $0x18] sm:$0xff] %v733
          %847 = vst [vmem:[#allocation2 + $0x20] sm:$0xff] %v737
          %848 = vst [vmem:[#allocation2 + $0x28] sm:$0xff] %v739
          %849 = vst [vmem:[#allocation2 + $0x30] sm:$0xff] %v743
          %850 = vst [vmem:[#allocation2 + $0x38] sm:$0xff] %v745
          %851 = vst [vmem:[#allocation2 + $0x40] sm:$0xff] %v749
          %852 = vst [vmem:[#allocation2 + $0x48] sm:$0xff] %v751
          %853 = vst [vmem:[#allocation2 + $0x50] sm:$0xff] %v755
          %854 = vst [vmem:[#allocation2 + $0x58] sm:$0xff] %v757
          %855 = vst [vmem:[#allocation2 + $0x60] sm:$0xff] %v761
          %856 = vst [vmem:[#allocation2 + $0x68] sm:$0xff] %v763
          %857 = vst [vmem:[#allocation2 + $0x70] sm:$0xff] %v767
          %858 = vst [vmem:[#allocation2 + $0x78] sm:$0xff] %v769
          %859 = vst [vmem:[#allocation2 + $0x80] sm:$0xff] %v773
          %860 = vst [vmem:[#allocation2 + $0x88] sm:$0xff] %v775
          %861 = vst [vmem:[#allocation2 + $0x90] sm:$0xff] %v779
          %862 = vst [vmem:[#allocation2 + $0x98] sm:$0xff] %v781
          %863 = vst [vmem:[#allocation2 + $0xa0] sm:$0xff] %v785
          %864 = vst [vmem:[#allocation2 + $0xa8] sm:$0xff] %v787
          %865 = vst [vmem:[#allocation2 + $0xb0] sm:$0xff] %v791
          %866 = vst [vmem:[#allocation2 + $0xb8] sm:$0xff] %v793
          %867 = vst [vmem:[#allocation2 + $0xc0] sm:$0xff] %v797
          %868 = vst [vmem:[#allocation2 + $0xc8] sm:$0xff] %v799
          %869 = vst [vmem:[#allocation2 + $0xd0] sm:$0xff] %v803
          %870 = vst [vmem:[#allocation2 + $0xd8] sm:$0xff] %v805
          %871 = vst [vmem:[#allocation2 + $0xe0] sm:$0xff] %v809
          %872 = vst [vmem:[#allocation2 + $0xe8] sm:$0xff] %v811
          %873 = vst [vmem:[#allocation2 + $0xf0] sm:$0xff] %v815
          %874 = vst [vmem:[#allocation2 + $0xf8] sm:$0xff] %v817
          %875 = vst [vmem:[#allocation2 + $0x100] sm:$0xff] %v821
          %876 = vst [vmem:[#allocation2 + $0x108] sm:$0xff] %v823
          %877 = vst [vmem:[#allocation2 + $0x110] sm:$0xff] %v827
          %878 = vst [vmem:[#allocation2 + $0x118] sm:$0xff] %v829
          %879 = vst [vmem:[#allocation2 + $0x120] sm:$0xff] %v833
          %880 = vst [vmem:[#allocation2 + $0x128] sm:$0xff] %v835
          %881 = vst [vmem:[#allocation2 + $0x130] sm:$0xff] %v839
          %882 = vst [vmem:[#allocation2 + $0x138] sm:$0xff] %v841
        $region106: #{tpu_custom_call.1} parent=89 // pred_fallthru
          _
        %v883 = vld [vmem:[%s392] sm:$0xff]
        %v884 = vld [vmem:[%s392 + $0x8] sm:$0xff]
        %v885 = vld [vmem:[%s392 + $0x10] sm:$0xff]
        %v886 = vld [vmem:[%s392 + $0x18] sm:$0xff]
        %v887 = vld [vmem:[#allocation5] sm:$0xff]
        %v888 = vld [vmem:[#allocation5 + $0x8] sm:$0xff]
        %v889 = vld [vmem:[#allocation5 + $0x10] sm:$0xff]
        %v890 = vld [vmem:[#allocation5 + $0x18] sm:$0xff]
        %v891 = vld [vmem:[%s5] sm:$0xff]
        %v892 = vld [vmem:[%s5 + $0x8] sm:$0xff]
        %v893 = vld [vmem:[%s5 + $0x10] sm:$0xff]
        %v894 = vld [vmem:[%s5 + $0x18] sm:$0xff]
        %896 = vset.pattern.permute.xlu0 0
        %897 = vperm.xlu0 %896, %v891
        %v898 = vpop.permute.xlu0 %897
        %901 = vset.pattern.permute.xlu0 0
        %902 = vperm.xlu0 %901, %v892
        %v903 = vpop.permute.xlu0 %902
        %906 = vset.pattern.permute.xlu0 0
        %907 = vperm.xlu0 %906, %v893
        %v908 = vpop.permute.xlu0 %907
        %911 = vset.pattern.permute.xlu0 0
        %912 = vperm.xlu0 %911, %v894
        %v913 = vpop.permute.xlu0 %912
        %vm915 = vcmask 261120
        %v917 = vsel %vm915, %v887, 0
        %v920 = vsel %vm915, %v888, 0
        %v923 = vsel %vm915, %v889, 0
        %v926 = vsel %vm915, %v890, 0
        %928 = vmatprep.subr.mxu0 0.0
        %929 = vmatpush1.msra.mxu0 %v883
        %930 = vmatprep.subr.mxu0 0.0
        %931 = vmatpush1.msra.mxu0 %v884
        %932 = vmatprep.subr.mxu0 0.0
        %933 = vmatpush1.msra.mxu0 %v885
        %934 = vmatprep.subr.mxu0 0.0
        %935 = vmatpush1.msra.mxu0 %v886
        %936 = vmatprep.subr.mxu0 0.0
        %937 = vmatpush1.msra.mxu0 0.0
        %938 = vmatprep.subr.mxu0 0.0
        %939 = vmatpush1.msra.mxu0 0.0
        %940 = vmatprep.subr.mxu0 0.0
        %941 = vmatpush1.msra.mxu0 0.0
        %942 = vmatprep.subr.mxu0 0.0
        %943 = vmatpush1.msra.mxu0 0.0
        %944 = vmatprep.subr.mxu0 0.0
        %945 = vmatpush1.msra.mxu0 0.0
        %946 = vmatprep.subr.mxu0 0.0
        %947 = vmatpush1.msra.mxu0 0.0
        %948 = vmatprep.subr.mxu0 0.0
        %949 = vmatpush1.msra.mxu0 0.0
        %950 = vmatprep.subr.mxu0 0.0
        %951 = vmatpush1.msra.mxu0 0.0
        %952 = vmatprep.subr.mxu0 0.0
        %953 = vmatpush1.msra.mxu0 0.0
        %954 = vmatprep.subr.mxu0 0.0
        %955 = vmatpush1.msra.mxu0 0.0
        %956 = vmatprep.subr.mxu0 0.0
        %957 = vmatpush1.msra.mxu0 0.0
        %958 = vmatprep.subr.mxu0 0.0
        %959 = vmatpush1.msra.mxu0 0.0
        %960 = vmatprep.subr.mxu0 0.0
        %961 = vmatpush1.msra.mxu0 0.0
        %962 = vmatprep.subr.mxu0 0.0
        %963 = vmatpush1.msra.mxu0 0.0
        %964 = vmatprep.subr.mxu0 0.0
        %965 = vmatpush1.msra.mxu0 0.0
        %966 = vmatprep.subr.mxu0 0.0
        %967 = vmatpush1.msra.mxu0 0.0
        %968 = vmatprep.subr.mxu0 0.0
        %969 = vmatpush1.msra.mxu0 0.0
        %970 = vmatprep.subr.mxu0 0.0
        %971 = vmatpush1.msra.mxu0 0.0
        %972 = vmatprep.subr.mxu0 0.0
        %973 = vmatpush1.msra.mxu0 0.0
        %974 = vmatprep.subr.mxu0 0.0
        %975 = vmatpush1.msra.mxu0 0.0
        %976 = vmatprep.subr.mxu0 0.0
        %977 = vmatpush1.msra.mxu0 0.0
        %978 = vmatprep.subr.mxu0 0.0
        %979 = vmatpush1.msra.mxu0 0.0
        %980 = vmatprep.subr.mxu0 0.0
        %981 = vmatpush1.msra.mxu0 0.0
        %982 = vmatprep.subr.mxu0 0.0
        %983 = vmatpush1.msra.mxu0 0.0
        %984 = vmatprep.subr.mxu0 0.0
        %985 = vmatpush1.msra.mxu0 0.0
        %986 = vmatprep.subr.mxu0 0.0
        %987 = vmatpush1.msra.mxu0 0.0
        %988 = vmatprep.subr.mxu0 0.0
        %989 = vmatpush1.msra.mxu0 0.0
        %990 = vmatprep.subr.mxu0 0.0
        %991 = vmatpush1.msra.mxu0 0.0
        %992 = vmatprep.mubr.f32.mxu0 0.0
        %993 = vmatmul.mubr.f32.gmra.mrb[0].mxu0 %v917
        %v994 = vpop.f32.mrb[0].mxu0
        %v995 = vadd.f32 %v898, %v994
        %v996 = vpop.f32.mrb[0].mxu0
        %997 = vmatprep.mubr.f32.mxu0 0.0
        %998 = vmatmul.mubr.f32.gmra.mrb[0].mxu0 %v920
        %v999 = vpop.f32.mrb[0].mxu0
        %v1000 = vadd.f32 %v903, %v999
        %v1001 = vpop.f32.mrb[0].mxu0
        %1002 = vmatprep.mubr.f32.mxu0 0.0
        %1003 = vmatmul.mubr.f32.gmra.mrb[0].mxu0 %v923
        %v1004 = vpop.f32.mrb[0].mxu0
        %v1005 = vadd.f32 %v908, %v1004
        %v1006 = vpop.f32.mrb[0].mxu0
        %1007 = vmatprep.mubr.f32.mxu0 0.0
        %1008 = vmatmul.mubr.f32.gmra.mrb[0].mxu0 %v926
        %v1009 = vpop.f32.mrb[0].mxu0
        %v1010 = vadd.f32 %v913, %v1009
        %v1011 = vpop.f32.mrb[0].mxu0
        %1012 = vdwg.mxu0
        %1013 = vst [vmem:[#allocation3] sm:$0xff] %v995
        %1014 = vst [vmem:[#allocation3 + $0x8] sm:$0xff] %v1000
        %1015 = vst [vmem:[#allocation3 + $0x10] sm:$0xff] %v1005
        %1016 = vst [vmem:[#allocation3 + $0x18] sm:$0xff] %v1010
        %v1017 = vld [vmem:[%s8] sm:$0xff]
        %v1018 = vld [vmem:[%s8 + $0x8] sm:$0xff]
        %v1019 = vld [vmem:[%s8 + $0x10] sm:$0xff]
        %v1020 = vld [vmem:[%s8 + $0x18] sm:$0xff]
        %1022 = vset.pattern.permute.xlu0 0
        %1023 = vperm.xlu0 %1022, %v1017
        %v1024 = vpop.permute.xlu0 %1023
        %1027 = vset.pattern.permute.xlu0 0
        %1028 = vperm.xlu0 %1027, %v1018
        %v1029 = vpop.permute.xlu0 %1028
        %1032 = vset.pattern.permute.xlu0 0
        %1033 = vperm.xlu0 %1032, %v1019
        %v1034 = vpop.permute.xlu0 %1033
        %1037 = vset.pattern.permute.xlu0 0
        %1038 = vperm.xlu0 %1037, %v1020
        %v1039 = vpop.permute.xlu0 %1038
        loop: start=0, step=1, limit=4
        $region107: #{tpu_custom_call.1} parent=89 // loop_pre_header
          _
        $region108: #{tpu_custom_call.1} parent=89 // loop_header
          %s1042 = sphi 0, %s1046
          %p1043 = scmp.ge.s32.totalorder %s1042, 4
          %v1047 = vphi %v1024, %v1679
          %v1048 = vphi %v1029, %v1680
          %v1049 = vphi %v1034, %v1681
          %v1050 = vphi %v1039, %v1682
        $region109: #{tpu_custom_call.1} parent=89 // loop_header_branch
          %1045 = sbr.rel (%p1043) target = $region113
        $region110: #{tpu_custom_call.1} parent=89 // loop_body
          %s1051 = smul.u32 %s1042, 8
          %s1052 = smul.u32 %s1042, 40
          %s1053 = sadd.s32 %s1052, 8
          %s1054 = scalar_lea.vmem [#allocation3], %s1051
          %v1055 = vld [vmem:[%s1054] sm:$0xff]
          %s1056 = sshra.s32 %s1052, 3
          %s1057 = sand.u32 %s1052, 7
          %s1058 = smul.u32 %s1056, 2
          %s1059 = smul.addr %s1058, 8
          %s1060 = scalar_lea.vmem [#allocation2], %s1059
          %v1061 = vld [vmem:[%s1060] sm:$0xff]
          %v1062 = vld [vmem:[%s1060 + $0x8] sm:$0xff]
          %s1063 = sshra.s32 %s1053, 3
          %s1064 = sand.u32 %s1053, 7
          %s1065 = smul.u32 %s1063, 2
          %s1066 = smul.addr %s1065, 8
          %s1067 = scalar_lea.vmem [#allocation2], %s1066
          %v1068 = vld [vmem:[%s1067] sm:$0xff]
          %v1069 = vld [vmem:[%s1067 + $0x8] sm:$0xff]
          %v1070 = vld [vmem:[%s1067 + $0x10] sm:$0xff]
          %v1071 = vld [vmem:[%s1067 + $0x18] sm:$0xff]
          %v1072 = vld [vmem:[%s1067 + $0x20] sm:$0xff]
          %v1073 = vld [vmem:[%s1067 + $0x28] sm:$0xff]
          %v1074 = vld [vmem:[%s1067 + $0x30] sm:$0xff]
          %v1075 = vld [vmem:[%s1067 + $0x38] sm:$0xff]
          %v1076 = vpack.c.bf16 %v1061, %v1061
          %v1077 = vpack.c.bf16 %v1062, %v1062
          %v1078 = vpack.c.bf16 %v1055, %v1055
          %1079 = vxpose.xlu0.c.b16.start [1/8] %v1076, 128
          %1080 = vxpose.xlu0.c.b16.cont [2/8] 0, 128
          %1081 = vxpose.xlu0.c.b16.cont [3/8] 0, 128
          %1082 = vxpose.xlu0.c.b16.cont [4/8] 0, 128
          %1083 = vxpose.xlu0.c.b16.cont [5/8] 0, 128
          %1084 = vxpose.xlu0.c.b16.cont [6/8] 0, 128
          %1085 = vxpose.xlu0.c.b16.cont [7/8] 0, 128
          %1086 = vxpose.xlu0.c.b16.end [8/8] 0, 128
          %v1087 = vpop.trf.xlu0
          %v1088 = vpop.trf.xlu0
          %v1089 = vpop.trf.xlu0
          %v1090 = vpop.trf.xlu0
          %v1091 = vpop.trf.xlu0
          %v1092 = vpop.trf.xlu0
          %v1093 = vpop.trf.xlu0
          %v1094 = vpop.trf.xlu0
          %1095 = vxpose.xlu0.c.b16.start [1/8] %v1077, 128
          %1096 = vxpose.xlu0.c.b16.cont [2/8] 0, 128
          %1097 = vxpose.xlu0.c.b16.cont [3/8] 0, 128
          %1098 = vxpose.xlu0.c.b16.cont [4/8] 0, 128
          %1099 = vxpose.xlu0.c.b16.cont [5/8] 0, 128
          %1100 = vxpose.xlu0.c.b16.cont [6/8] 0, 128
          %1101 = vxpose.xlu0.c.b16.cont [7/8] 0, 128
          %1102 = vxpose.xlu0.c.b16.end [8/8] 0, 128
          %v1103 = vpop.trf.xlu0
          %v1104 = vpop.trf.xlu0
          %v1105 = vpop.trf.xlu0
          %v1106 = vpop.trf.xlu0
          %v1107 = vpop.trf.xlu0
          %v1108 = vpop.trf.xlu0
          %v1109 = vpop.trf.xlu0
          %v1110 = vpop.trf.xlu0
          %vm1111 = vcmask 64512
          %v1113 = vsel %vm1111, %v1087, 0
          %v1116 = vsel %vm1111, %v1088, 0
          %v1119 = vsel %vm1111, %v1089, 0
          %v1122 = vsel %vm1111, %v1090, 0
          %v1125 = vsel %vm1111, %v1091, 0
          %v1128 = vsel %vm1111, %v1092, 0
          %v1131 = vsel %vm1111, %v1093, 0
          %v1134 = vsel %vm1111, %v1094, 0
          %v1137 = vsel %vm1111, %v1103, 0
          %v1140 = vsel %vm1111, %v1104, 0
          %v1143 = vsel %vm1111, %v1105, 0
          %v1146 = vsel %vm1111, %v1106, 0
          %v1149 = vsel %vm1111, %v1107, 0
          %v1152 = vsel %vm1111, %v1108, 0
          %v1155 = vsel %vm1111, %v1109, 0
          %v1158 = vsel %vm1111, %v1110, 0
          %vm1160 = vcmask 1043456
          %v1162 = vsel %vm1160, %v1078, 0
          %1164 = vmatprep.subr.bf16.mxu0 0
          %1165 = vmatpush1.bf16.msra.mxu0 %v1162
          %1166 = vmatprep.subr.bf16.mxu0 0
          %1167 = vmatpush1.bf16.msra.mxu0 0
          %1168 = vmatprep.subr.bf16.mxu0 0
          %1169 = vmatpush1.bf16.msra.mxu0 0
          %1170 = vmatprep.subr.bf16.mxu0 0
          %1171 = vmatpush1.bf16.msra.mxu0 0
          %1172 = vmatprep.subr.bf16.mxu0 0
          %1173 = vmatpush1.bf16.msra.mxu0 0
          %1174 = vmatprep.subr.bf16.mxu0 0
          %1175 = vmatpush1.bf16.msra.mxu0 0
          %1176 = vmatprep.subr.bf16.mxu0 0
          %1177 = vmatpush1.bf16.msra.mxu0 0
          %1178 = vmatprep.subr.bf16.mxu0 0
          %1179 = vmatpush1.bf16.msra.mxu0 0
          %1180 = vmatprep.subr.bf16.mxu0 0
          %1181 = vmatpush1.bf16.msra.mxu0 0
          %1182 = vmatprep.subr.bf16.mxu0 0
          %1183 = vmatpush1.bf16.msra.mxu0 0
          %1184 = vmatprep.subr.bf16.mxu0 0
          %1185 = vmatpush1.bf16.msra.mxu0 0
          %1186 = vmatprep.subr.bf16.mxu0 0
          %1187 = vmatpush1.bf16.msra.mxu0 0
          %1188 = vmatprep.subr.bf16.mxu0 0
          %1189 = vmatpush1.bf16.msra.mxu0 0
          %1190 = vmatprep.subr.bf16.mxu0 0
          %1191 = vmatpush1.bf16.msra.mxu0 0
          %1192 = vmatprep.subr.bf16.mxu0 0
          %1193 = vmatpush1.bf16.msra.mxu0 0
          %1194 = vmatprep.subr.bf16.mxu0 0
          %1195 = vmatpush1.bf16.msra.mxu0 0
          %1196 = vmatprep.mubr.bf16.mxu0 0
          %1197 = vmatmul.mubr.bf16.gmra.mrb[0].mxu0 %v1113
          %v1198 = vpop.f32.mrb[0].mxu0
          %v1199 = vadd.f32 0.0, %v1198
          %v1200 = vpop.f32.mrb[0].mxu0
          %v1201 = vpop.f32.mrb[0].mxu0
          %v1202 = vadd.f32 0.0, %v1201
          %v1203 = vpop.f32.mrb[0].mxu0
          %1204 = vmatprep.mubr.bf16.mxu0 0
          %1205 = vmatmul.mubr.bf16.gmra.mrb[0].mxu0 %v1116
          %v1206 = vpop.f32.mrb[0].mxu0
          %v1207 = vadd.f32 0.0, %v1206
          %v1208 = vpop.f32.mrb[0].mxu0
          %v1209 = vpop.f32.mrb[0].mxu0
          %v1210 = vadd.f32 0.0, %v1209
          %v1211 = vpop.f32.mrb[0].mxu0
          %1212 = vmatprep.mubr.bf16.mxu0 0
          %1213 = vmatmul.mubr.bf16.gmra.mrb[0].mxu0 %v1119
          %v1214 = vpop.f32.mrb[0].mxu0
          %v1215 = vadd.f32 0.0, %v1214
          %v1216 = vpop.f32.mrb[0].mxu0
          %v1217 = vpop.f32.mrb[0].mxu0
          %v1218 = vadd.f32 0.0, %v1217
          %v1219 = vpop.f32.mrb[0].mxu0
          %1220 = vmatprep.mubr.bf16.mxu0 0
          %1221 = vmatmul.mubr.bf16.gmra.mrb[0].mxu0 %v1122
          %v1222 = vpop.f32.mrb[0].mxu0
          %v1223 = vadd.f32 0.0, %v1222
          %v1224 = vpop.f32.mrb[0].mxu0
          %v1225 = vpop.f32.mrb[0].mxu0
          %v1226 = vadd.f32 0.0, %v1225
          %v1227 = vpop.f32.mrb[0].mxu0
          %1228 = vmatprep.mubr.bf16.mxu0 0
          %1229 = vmatmul.mubr.bf16.gmra.mrb[0].mxu0 %v1125
          %v1230 = vpop.f32.mrb[0].mxu0
          %v1231 = vadd.f32 0.0, %v1230
          %v1232 = vpop.f32.mrb[0].mxu0
          %v1233 = vpop.f32.mrb[0].mxu0
          %v1234 = vadd.f32 0.0, %v1233
          %v1235 = vpop.f32.mrb[0].mxu0
          %1236 = vmatprep.mubr.bf16.mxu0 0
          %1237 = vmatmul.mubr.bf16.gmra.mrb[0].mxu0 %v1128
          %v1238 = vpop.f32.mrb[0].mxu0
          %v1239 = vadd.f32 0.0, %v1238
          %v1240 = vpop.f32.mrb[0].mxu0
          %v1241 = vpop.f32.mrb[0].mxu0
          %v1242 = vadd.f32 0.0, %v1241
          %v1243 = vpop.f32.mrb[0].mxu0
          %1244 = vmatprep.mubr.bf16.mxu0 0
          %1245 = vmatmul.mubr.bf16.gmra.mrb[0].mxu0 %v1131
          %v1246 = vpop.f32.mrb[0].mxu0
          %v1247 = vadd.f32 0.0, %v1246
          %v1248 = vpop.f32.mrb[0].mxu0
          %v1249 = vpop.f32.mrb[0].mxu0
          %v1250 = vadd.f32 0.0, %v1249
          %v1251 = vpop.f32.mrb[0].mxu0
          %1252 = vmatprep.mubr.bf16.mxu0 0
          %1253 = vmatmul.mubr.bf16.gmra.mrb[0].mxu0 %v1134
          %v1254 = vpop.f32.mrb[0].mxu0
          %v1255 = vadd.f32 0.0, %v1254
          %v1256 = vpop.f32.mrb[0].mxu0
          %v1257 = vpop.f32.mrb[0].mxu0
          %v1258 = vadd.f32 0.0, %v1257
          %v1259 = vpop.f32.mrb[0].mxu0
          %1260 = vmatprep.mubr.bf16.mxu0 0
          %1261 = vmatmul.mubr.bf16.gmra.mrb[0].mxu0 %v1137
          %v1262 = vpop.f32.mrb[0].mxu0
          %v1263 = vadd.f32 0.0, %v1262
          %v1264 = vpop.f32.mrb[0].mxu0
          %v1265 = vpop.f32.mrb[0].mxu0
          %v1266 = vadd.f32 0.0, %v1265
          %v1267 = vpop.f32.mrb[0].mxu0
          %1268 = vmatprep.mubr.bf16.mxu0 0
          %1269 = vmatmul.mubr.bf16.gmra.mrb[0].mxu0 %v1140
          %v1270 = vpop.f32.mrb[0].mxu0
          %v1271 = vadd.f32 0.0, %v1270
          %v1272 = vpop.f32.mrb[0].mxu0
          %v1273 = vpop.f32.mrb[0].mxu0
          %v1274 = vadd.f32 0.0, %v1273
          %v1275 = vpop.f32.mrb[0].mxu0
          %1276 = vmatprep.mubr.bf16.mxu0 0
          %1277 = vmatmul.mubr.bf16.gmra.mrb[0].mxu0 %v1143
          %v1278 = vpop.f32.mrb[0].mxu0
          %v1279 = vadd.f32 0.0, %v1278
          %v1280 = vpop.f32.mrb[0].mxu0
          %v1281 = vpop.f32.mrb[0].mxu0
          %v1282 = vadd.f32 0.0, %v1281
          %v1283 = vpop.f32.mrb[0].mxu0
          %1284 = vmatprep.mubr.bf16.mxu0 0
          %1285 = vmatmul.mubr.bf16.gmra.mrb[0].mxu0 %v1146
          %v1286 = vpop.f32.mrb[0].mxu0
          %v1287 = vadd.f32 0.0, %v1286
          %v1288 = vpop.f32.mrb[0].mxu0
          %v1289 = vpop.f32.mrb[0].mxu0
          %v1290 = vadd.f32 0.0, %v1289
          %v1291 = vpop.f32.mrb[0].mxu0
          %1292 = vmatprep.mubr.bf16.mxu0 0
          %1293 = vmatmul.mubr.bf16.gmra.mrb[0].mxu0 %v1149
          %v1294 = vpop.f32.mrb[0].mxu0
          %v1295 = vadd.f32 0.0, %v1294
          %v1296 = vpop.f32.mrb[0].mxu0
          %v1297 = vpop.f32.mrb[0].mxu0
          %v1298 = vadd.f32 0.0, %v1297
          %v1299 = vpop.f32.mrb[0].mxu0
          %1300 = vmatprep.mubr.bf16.mxu0 0
          %1301 = vmatmul.mubr.bf16.gmra.mrb[0].mxu0 %v1152
          %v1302 = vpop.f32.mrb[0].mxu0
          %v1303 = vadd.f32 0.0, %v1302
          %v1304 = vpop.f32.mrb[0].mxu0
          %v1305 = vpop.f32.mrb[0].mxu0
          %v1306 = vadd.f32 0.0, %v1305
          %v1307 = vpop.f32.mrb[0].mxu0
          %1308 = vmatprep.mubr.bf16.mxu0 0
          %1309 = vmatmul.mubr.bf16.gmra.mrb[0].mxu0 %v1155
          %v1310 = vpop.f32.mrb[0].mxu0
          %v1311 = vadd.f32 0.0, %v1310
          %v1312 = vpop.f32.mrb[0].mxu0
          %v1313 = vpop.f32.mrb[0].mxu0
          %v1314 = vadd.f32 0.0, %v1313
          %v1315 = vpop.f32.mrb[0].mxu0
          %1316 = vmatprep.mubr.bf16.mxu0 0
          %1317 = vmatmul.mubr.bf16.gmra.mrb[0].mxu0 %v1158
          %v1318 = vpop.f32.mrb[0].mxu0
          %v1319 = vadd.f32 0.0, %v1318
          %v1320 = vpop.f32.mrb[0].mxu0
          %v1321 = vpop.f32.mrb[0].mxu0
          %v1322 = vadd.f32 0.0, %v1321
          %v1323 = vpop.f32.mrb[0].mxu0
          %1324 = vdwg.mxu0
          %v1325 = vmax.f32 %v1199, %v1215
          %v1326 = vmax.f32 %v1202, %v1218
          %v1327 = vmax.f32 %v1207, %v1223
          %v1328 = vmax.f32 %v1210, %v1226
          %v1329 = vmax.f32 %v1325, %v1231
          %v1330 = vmax.f32 %v1326, %v1234
          %v1331 = vmax.f32 %v1327, %v1239
          %v1332 = vmax.f32 %v1328, %v1242
          %v1333 = vmax.f32 %v1329, %v1247
          %v1334 = vmax.f32 %v1330, %v1250
          %v1335 = vmax.f32 %v1331, %v1255
          %v1336 = vmax.f32 %v1332, %v1258
          %v1337 = vmax.f32 %v1333, %v1263
          %v1338 = vmax.f32 %v1334, %v1266
          %v1339 = vmax.f32 %v1335, %v1271
          %v1340 = vmax.f32 %v1336, %v1274
          %v1341 = vmax.f32 %v1337, %v1279
          %v1342 = vmax.f32 %v1338, %v1282
          %v1343 = vmax.f32 %v1339, %v1287
          %v1344 = vmax.f32 %v1340, %v1290
          %v1345 = vmax.f32 %v1341, %v1295
          %v1346 = vmax.f32 %v1342, %v1298
          %v1347 = vmax.f32 %v1343, %v1303
          %v1348 = vmax.f32 %v1344, %v1306
          %v1349 = vmax.f32 %v1345, %v1311
          %v1350 = vmax.f32 %v1346, %v1314
          %v1351 = vmax.f32 %v1347, %v1319
          %v1352 = vmax.f32 %v1348, %v1322
          %v1353 = vmax.f32 %v1349, %v1350
          %v1354 = vmax.f32 %v1351, %v1352
          %v1355 = vmax.f32 %v1353, %v1354
          %v1356 = vrot.slane %v1355, 4
          %v1357 = vmax.f32 %v1355, %v1356
          %v1358 = vrot.slane %v1357, 2
          %v1359 = vmax.f32 %v1357, %v1358
          %v1360 = vrot.slane %v1359, 1
          %v1361 = vmax.f32 %v1359, %v1360
          %v1362 = vsub.f32 %v1199, %v1361
          %v1363 = vsub.f32 %v1202, %v1361
          %v1364 = vsub.f32 %v1207, %v1361
          %v1365 = vsub.f32 %v1210, %v1361
          %v1366 = vsub.f32 %v1215, %v1361
          %v1367 = vsub.f32 %v1218, %v1361
          %v1368 = vsub.f32 %v1223, %v1361
          %v1369 = vsub.f32 %v1226, %v1361
          %v1370 = vsub.f32 %v1231, %v1361
          %v1371 = vsub.f32 %v1234, %v1361
          %v1372 = vsub.f32 %v1239, %v1361
          %v1373 = vsub.f32 %v1242, %v1361
          %v1374 = vsub.f32 %v1247, %v1361
          %v1375 = vsub.f32 %v1250, %v1361
          %v1376 = vsub.f32 %v1255, %v1361
          %v1377 = vsub.f32 %v1258, %v1361
          %v1378 = vsub.f32 %v1263, %v1361
          %v1379 = vsub.f32 %v1266, %v1361
          %v1380 = vsub.f32 %v1271, %v1361
          %v1381 = vsub.f32 %v1274, %v1361
          %v1382 = vsub.f32 %v1279, %v1361
          %v1383 = vsub.f32 %v1282, %v1361
          %v1384 = vsub.f32 %v1287, %v1361
          %v1385 = vsub.f32 %v1290, %v1361
          %v1386 = vsub.f32 %v1295, %v1361
          %v1387 = vsub.f32 %v1298, %v1361
          %v1388 = vsub.f32 %v1303, %v1361
          %v1389 = vsub.f32 %v1306, %v1361
          %v1390 = vsub.f32 %v1311, %v1361
          %v1391 = vsub.f32 %v1314, %v1361
          %v1392 = vsub.f32 %v1319, %v1361
          %v1393 = vsub.f32 %v1322, %v1361
          %v1394 = vmul.f32 %v1362, 1.442695
          %v1395 = vpow.pop %v1394
          %v1396 = vmul.f32 %v1363, 1.442695
          %v1397 = vpow.pop %v1396
          %v1398 = vmul.f32 %v1364, 1.442695
          %v1399 = vpow.pop %v1398
          %v1400 = vmul.f32 %v1365, 1.442695
          %v1401 = vpow.pop %v1400
          %v1402 = vmul.f32 %v1366, 1.442695
          %v1403 = vpow.pop %v1402
          %v1404 = vmul.f32 %v1367, 1.442695
          %v1405 = vpow.pop %v1404
          %v1406 = vmul.f32 %v1368, 1.442695
          %v1407 = vpow.pop %v1406
          %v1408 = vmul.f32 %v1369, 1.442695
          %v1409 = vpow.pop %v1408
          %v1410 = vmul.f32 %v1370, 1.442695
          %v1411 = vpow.pop %v1410
          %v1412 = vmul.f32 %v1371, 1.442695
          %v1413 = vpow.pop %v1412
          %v1414 = vmul.f32 %v1372, 1.442695
          %v1415 = vpow.pop %v1414
          %v1416 = vmul.f32 %v1373, 1.442695
          %v1417 = vpow.pop %v1416
          %v1418 = vmul.f32 %v1374, 1.442695
          %v1419 = vpow.pop %v1418
          %v1420 = vmul.f32 %v1375, 1.442695
          %v1421 = vpow.pop %v1420
          %v1422 = vmul.f32 %v1376, 1.442695
          %v1423 = vpow.pop %v1422
          %v1424 = vmul.f32 %v1377, 1.442695
          %v1425 = vpow.pop %v1424
          %v1426 = vmul.f32 %v1378, 1.442695
          %v1427 = vpow.pop %v1426
          %v1428 = vmul.f32 %v1379, 1.442695
          %v1429 = vpow.pop %v1428
          %v1430 = vmul.f32 %v1380, 1.442695
          %v1431 = vpow.pop %v1430
          %v1432 = vmul.f32 %v1381, 1.442695
          %v1433 = vpow.pop %v1432
          %v1434 = vmul.f32 %v1382, 1.442695
          %v1435 = vpow.pop %v1434
          %v1436 = vmul.f32 %v1383, 1.442695
          %v1437 = vpow.pop %v1436
          %v1438 = vmul.f32 %v1384, 1.442695
          %v1439 = vpow.pop %v1438
          %v1440 = vmul.f32 %v1385, 1.442695
          %v1441 = vpow.pop %v1440
          %v1442 = vmul.f32 %v1386, 1.442695
          %v1443 = vpow.pop %v1442
          %v1444 = vmul.f32 %v1387, 1.442695
          %v1445 = vpow.pop %v1444
          %v1446 = vmul.f32 %v1388, 1.442695
          %v1447 = vpow.pop %v1446
          %v1448 = vmul.f32 %v1389, 1.442695
          %v1449 = vpow.pop %v1448
          %v1450 = vmul.f32 %v1390, 1.442695
          %v1451 = vpow.pop %v1450
          %v1452 = vmul.f32 %v1391, 1.442695
          %v1453 = vpow.pop %v1452
          %v1454 = vmul.f32 %v1392, 1.442695
          %v1455 = vpow.pop %v1454
          %v1456 = vmul.f32 %v1393, 1.442695
          %v1457 = vpow.pop %v1456
          %v1458 = vadd.f32 %v1395, %v1397
          %v1459 = vadd.f32 %v1458, %v1399
          %v1460 = vadd.f32 %v1459, %v1401
          %v1461 = vadd.f32 %v1460, %v1403
          %v1462 = vadd.f32 %v1461, %v1405
          %v1463 = vadd.f32 %v1462, %v1407
          %v1464 = vadd.f32 %v1463, %v1409
          %v1465 = vadd.f32 %v1464, %v1411
          %v1466 = vadd.f32 %v1465, %v1413
          %v1467 = vadd.f32 %v1466, %v1415
          %v1468 = vadd.f32 %v1467, %v1417
          %v1469 = vadd.f32 %v1468, %v1419
          %v1470 = vadd.f32 %v1469, %v1421
          %v1471 = vadd.f32 %v1470, %v1423
          %v1472 = vadd.f32 %v1471, %v1425
          %v1473 = vadd.f32 %v1472, %v1427
          %v1474 = vadd.f32 %v1473, %v1429
          %v1475 = vadd.f32 %v1474, %v1431
          %v1476 = vadd.f32 %v1475, %v1433
          %v1477 = vadd.f32 %v1476, %v1435
          %v1478 = vadd.f32 %v1477, %v1437
          %v1479 = vadd.f32 %v1478, %v1439
          %v1480 = vadd.f32 %v1479, %v1441
          %v1481 = vadd.f32 %v1480, %v1443
          %v1482 = vadd.f32 %v1481, %v1445
          %v1483 = vadd.f32 %v1482, %v1447
          %v1484 = vadd.f32 %v1483, %v1449
          %v1485 = vadd.f32 %v1484, %v1451
          %v1486 = vadd.f32 %v1485, %v1453
          %v1487 = vadd.f32 %v1486, %v1455
          %v1488 = vadd.f32 %v1487, %v1457
          %v1489 = vrot.slane %v1488, 4
          %v1490 = vadd.f32 %v1488, %v1489
          %v1491 = vrot.slane %v1490, 2
          %v1492 = vadd.f32 %v1490, %v1491
          %v1493 = vrot.slane %v1492, 1
          %v1494 = vadd.f32 %v1492, %v1493
          %v1495 = vpack.c.bf16 %v1070, %v1068
          %v1496 = vpack.c.bf16 %v1071, %v1069
          %v1497 = vpack.c.bf16 %v1074, %v1072
          %v1498 = vpack.c.bf16 %v1075, %v1073
          %v1499 = vpack.c.bf16 %v1397, %v1395
          %v1500 = vpack.c.bf16 %v1401, %v1399
          %v1501 = vpack.c.bf16 %v1405, %v1403
          %v1502 = vpack.c.bf16 %v1409, %v1407
          %v1503 = vpack.c.bf16 %v1413, %v1411
          %v1504 = vpack.c.bf16 %v1417, %v1415
          %v1505 = vpack.c.bf16 %v1421, %v1419
          %v1506 = vpack.c.bf16 %v1425, %v1423
          %v1507 = vpack.c.bf16 %v1429, %v1427
          %v1508 = vpack.c.bf16 %v1433, %v1431
          %v1509 = vpack.c.bf16 %v1437, %v1435
          %v1510 = vpack.c.bf16 %v1441, %v1439
          %v1511 = vpack.c.bf16 %v1445, %v1443
          %v1512 = vpack.c.bf16 %v1449, %v1447
          %v1513 = vpack.c.bf16 %v1453, %v1451
          %v1514 = vpack.c.bf16 %v1457, %v1455
          %1515 = vmatprep.subr.bf16.mxu0 0
          %1516 = vmatpush1.bf16.msra.mxu0 %v1499
          %1517 = vmatprep.subr.bf16.mxu0 0
          %1518 = vmatpush1.bf16.msra.mxu0 %v1500
          %1519 = vmatprep.subr.bf16.mxu0 0
          %1520 = vmatpush1.bf16.msra.mxu0 %v1501
          %1521 = vmatprep.subr.bf16.mxu0 0
          %1522 = vmatpush1.bf16.msra.mxu0 %v1502
          %1523 = vmatprep.subr.bf16.mxu0 0
          %1524 = vmatpush1.bf16.msra.mxu0 %v1503
          %1525 = vmatprep.subr.bf16.mxu0 0
          %1526 = vmatpush1.bf16.msra.mxu0 %v1504
          %1527 = vmatprep.subr.bf16.mxu0 0
          %1528 = vmatpush1.bf16.msra.mxu0 %v1505
          %1529 = vmatprep.subr.bf16.mxu0 0
          %1530 = vmatpush1.bf16.msra.mxu0 %v1506
          %1531 = vmatprep.subr.bf16.mxu0 0
          %1532 = vmatpush1.bf16.msra.mxu0 %v1507
          %1533 = vmatprep.subr.bf16.mxu0 0
          %1534 = vmatpush1.bf16.msra.mxu0 %v1508
          %1535 = vmatprep.subr.bf16.mxu0 0
          %1536 = vmatpush1.bf16.msra.mxu0 %v1509
          %1537 = vmatprep.subr.bf16.mxu0 0
          %1538 = vmatpush1.bf16.msra.mxu0 %v1510
          %1539 = vmatprep.subr.bf16.mxu0 0
          %1540 = vmatpush1.bf16.msra.mxu0 %v1511
          %1541 = vmatprep.subr.bf16.mxu0 0
          %1542 = vmatpush1.bf16.msra.mxu0 %v1512
          %1543 = vmatprep.subr.bf16.mxu0 0
          %1544 = vmatpush1.bf16.msra.mxu0 %v1513
          %1545 = vmatprep.subr.bf16.mxu0 0
          %1546 = vmatpush1.bf16.msra.mxu0 %v1514
          %1547 = vmatprep.mubr.bf16.mxu0 %v1496
          %1548 = vmatmul.mubr.bf16.gmra.mrb[0].mxu0 %v1495
          %v1549 = vpop.f32.mrb[0].mxu0
          %v1550 = vadd.f32 0.0, %v1549
          %v1551 = vpop.f32.mrb[0].mxu0
          %v1552 = vpop.f32.mrb[0].mxu0
          %v1553 = vadd.f32 0.0, %v1552
          %v1554 = vpop.f32.mrb[0].mxu0
          %1555 = vmatprep.mubr.bf16.mxu0 %v1498
          %1556 = vmatmul.mubr.bf16.gmra.mrb[0].mxu0 %v1497
          %v1557 = vpop.f32.mrb[0].mxu0
          %v1558 = vadd.f32 0.0, %v1557
          %v1559 = vpop.f32.mrb[0].mxu0
          %v1560 = vpop.f32.mrb[0].mxu0
          %v1561 = vadd.f32 0.0, %v1560
          %v1562 = vpop.f32.mrb[0].mxu0
          %1563 = vdwg.mxu0
          %s1564 = sld [smem:[#allocation9 + %s1042]]
          %v1565 = vrcp.pop %v1494
          %v1566 = vstv %s1564
          %v1567 = vmul.f32 %v1566, %v1565
          %v1568 = vmul.f32 %v1567, %v1550
          %v1569 = vmul.f32 %v1567, %v1553
          %v1570 = vmul.f32 %v1567, %v1558
          %v1571 = vmul.f32 %v1567, %v1561
          %v1572 = vadd.f32 %v1568, %v883
          %v1573 = vadd.f32 %v1569, %v884
          %v1574 = vadd.f32 %v1570, %v885
          %v1575 = vadd.f32 %v1571, %v886
          %s1576 = smul.u32 %s1042, 32
          %s1577 = scalar_lea.vmem %s7, %s1576
          %v1578 = vld [vmem:[%s1577] sm:$0xff]
          %v1579 = vld [vmem:[%s1577 + $0x8] sm:$0xff]
          %v1580 = vld [vmem:[%s1577 + $0x10] sm:$0xff]
          %v1581 = vld [vmem:[%s1577 + $0x18] sm:$0xff]
          %v1583 = vsel %vm915, %v1578, 0
          %v1586 = vsel %vm915, %v1579, 0
          %v1589 = vsel %vm915, %v1580, 0
          %v1592 = vsel %vm915, %v1581, 0
          %1594 = vmatprep.subr.mxu0 0.0
          %1595 = vmatpush1.msra.mxu0 %v1572
          %1596 = vmatprep.subr.mxu0 0.0
          %1597 = vmatpush1.msra.mxu0 %v1573
          %1598 = vmatprep.subr.mxu0 0.0
          %1599 = vmatpush1.msra.mxu0 %v1574
          %1600 = vmatprep.subr.mxu0 0.0
          %1601 = vmatpush1.msra.mxu0 %v1575
          %1602 = vmatprep.subr.mxu0 0.0
          %1603 = vmatpush1.msra.mxu0 0.0
          %1604 = vmatprep.subr.mxu0 0.0
          %1605 = vmatpush1.msra.mxu0 0.0
          %1606 = vmatprep.subr.mxu0 0.0
          %1607 = vmatpush1.msra.mxu0 0.0
          %1608 = vmatprep.subr.mxu0 0.0
          %1609 = vmatpush1.msra.mxu0 0.0
          %1610 = vmatprep.subr.mxu0 0.0
          %1611 = vmatpush1.msra.mxu0 0.0
          %1612 = vmatprep.subr.mxu0 0.0
          %1613 = vmatpush1.msra.mxu0 0.0
          %1614 = vmatprep.subr.mxu0 0.0
          %1615 = vmatpush1.msra.mxu0 0.0
          %1616 = vmatprep.subr.mxu0 0.0
          %1617 = vmatpush1.msra.mxu0 0.0
          %1618 = vmatprep.subr.mxu0 0.0
          %1619 = vmatpush1.msra.mxu0 0.0
          %1620 = vmatprep.subr.mxu0 0.0
          %1621 = vmatpush1.msra.mxu0 0.0
          %1622 = vmatprep.subr.mxu0 0.0
          %1623 = vmatpush1.msra.mxu0 0.0
          %1624 = vmatprep.subr.mxu0 0.0
          %1625 = vmatpush1.msra.mxu0 0.0
          %1626 = vmatprep.subr.mxu0 0.0
          %1627 = vmatpush1.msra.mxu0 0.0
          %1628 = vmatprep.subr.mxu0 0.0
          %1629 = vmatpush1.msra.mxu0 0.0
          %1630 = vmatprep.subr.mxu0 0.0
          %1631 = vmatpush1.msra.mxu0 0.0
          %1632 = vmatprep.subr.mxu0 0.0
          %1633 = vmatpush1.msra.mxu0 0.0
          %1634 = vmatprep.subr.mxu0 0.0
          %1635 = vmatpush1.msra.mxu0 0.0
          %1636 = vmatprep.subr.mxu0 0.0
          %1637 = vmatpush1.msra.mxu0 0.0
          %1638 = vmatprep.subr.mxu0 0.0
          %1639 = vmatpush1.msra.mxu0 0.0
          %1640 = vmatprep.subr.mxu0 0.0
          %1641 = vmatpush1.msra.mxu0 0.0
          %1642 = vmatprep.subr.mxu0 0.0
          %1643 = vmatpush1.msra.mxu0 0.0
          %1644 = vmatprep.subr.mxu0 0.0
          %1645 = vmatpush1.msra.mxu0 0.0
          %1646 = vmatprep.subr.mxu0 0.0
          %1647 = vmatpush1.msra.mxu0 0.0
          %1648 = vmatprep.subr.mxu0 0.0
          %1649 = vmatpush1.msra.mxu0 0.0
          %1650 = vmatprep.subr.mxu0 0.0
          %1651 = vmatpush1.msra.mxu0 0.0
          %1652 = vmatprep.subr.mxu0 0.0
          %1653 = vmatpush1.msra.mxu0 0.0
          %1654 = vmatprep.subr.mxu0 0.0
          %1655 = vmatpush1.msra.mxu0 0.0
          %1656 = vmatprep.subr.mxu0 0.0
          %1657 = vmatpush1.msra.mxu0 0.0
          %1658 = vmatprep.mubr.f32.mxu0 0.0
          %1659 = vmatmul.mubr.f32.gmra.mrb[0].mxu0 %v1583
          %v1660 = vpop.f32.mrb[0].mxu0
          %v1661 = vadd.f32 0.0, %v1660
          %v1662 = vpop.f32.mrb[0].mxu0
          %1663 = vmatprep.mubr.f32.mxu0 0.0
          %1664 = vmatmul.mubr.f32.gmra.mrb[0].mxu0 %v1586
          %v1665 = vpop.f32.mrb[0].mxu0
          %v1666 = vadd.f32 0.0, %v1665
          %v1667 = vpop.f32.mrb[0].mxu0
          %1668 = vmatprep.mubr.f32.mxu0 0.0
          %1669 = vmatmul.mubr.f32.gmra.mrb[0].mxu0 %v1589
          %v1670 = vpop.f32.mrb[0].mxu0
          %v1671 = vadd.f32 0.0, %v1670
          %v1672 = vpop.f32.mrb[0].mxu0
          %1673 = vmatprep.mubr.f32.mxu0 0.0
          %1674 = vmatmul.mubr.f32.gmra.mrb[0].mxu0 %v1592
          %v1675 = vpop.f32.mrb[0].mxu0
          %v1676 = vadd.f32 0.0, %v1675
          %v1677 = vpop.f32.mrb[0].mxu0
          %1678 = vdwg.mxu0
          %v1679 = vadd.f32 %v1047, %v1661
          %v1680 = vadd.f32 %v1048, %v1666
          %v1681 = vadd.f32 %v1049, %v1671
          %v1682 = vadd.f32 %v1050, %v1676
        $region111: #{tpu_custom_call.1} parent=89 // loop_footer
          %s1046 = sadd.s32 1, %s1042
        $region112: #{tpu_custom_call.1} parent=89 // loop_footer_branch
          %1041 = sbr.rel target = $region108
        $region113: #{tpu_custom_call.1} parent=89 // loop_exit
          _
        %1683 = vst [vmem:[%s438] sm:$0xff] %v1047
        %1684 = vst [vmem:[%s438 + $0x8] sm:$0xff] %v1048
        %1685 = vst [vmem:[%s438 + $0x10] sm:$0xff] %v1049
        %1686 = vst [vmem:[%s438 + $0x18] sm:$0xff] %v1050
        %s1687 = sand.u32 %s248, 1
        %s1688 = scalar_lea.sflag [#allocation7], %s1687
        %s1689 = sand.u32 %s248, 1
        %s1690 = smul.addr %s1689, 32
        %s1691 = scalar_lea.vmem [#allocation10], %s1690
        // Predicated region
        $region114: #{tpu_custom_call.1} parent=89 // pred_check
          %p1692 = pneg %p258
        $region115: #{tpu_custom_call.1} parent=89 // pred_check_branch
          %1694 = sbr.rel (%p1692) target = $region117
        $region116: #{tpu_custom_call.1} parent=89 // pred_region
          %s1696 = ssub.s32 512, 512
          %1697 = vsyncadd %s1688, %s1696
          %s1698 = smul.addr %s29, 8
          %s1699 = sadd.s32 %s30, %s1698
          %s1700 = smul.addr %s1699, 128
          %s1701 = scalar_lea.hbm %s9, %s1700
          %s1702 = sshll.u32 %s1691, 4
          %s1703 = int_to_ptr.vmem [resolvable:$true] %s1702
          %1708 = dma.vmem_to_hbm [thread:$0]  %s1703, 512, %s1701, %s1688, 128, 256, 8
        $region117: #{tpu_custom_call.1} parent=89 // pred_fallthru
          _
      $region90: #{tpu_custom_call.1} parent=5 // pred_fallthru
        _
      %p1709 = scmp.le.s32.totalorder 2, %s20
      // Predicated region
      $region118: #{tpu_custom_call.1} parent=5 // pred_check
        %p1710 = pneg %p1709
      $region119: #{tpu_custom_call.1} parent=5 // pred_check_branch
        %1712 = sbr.rel (%p1710) target = $region121
      $region120: #{tpu_custom_call.1} parent=5 // pred_region
        %s1713 = ssub.s32 %s20, 2
        // Predicated region
        $region122: #{tpu_custom_call.1} parent=120 // pred_check
          %p1714 = pneg %p264
        $region123: #{tpu_custom_call.1} parent=120 // pred_check_branch
          %1716 = sbr.rel (%p1714) target = $region125
        $region124: #{tpu_custom_call.1} parent=120 // pred_region
          %s1717 = sand.u32 %s249, 1
          %s1718 = scalar_lea.sflag [#allocation7], %s1717
          %s1719 = sand.u32 %s249, 1
          %s1720 = smul.addr %s1719, 32
          %s1721 = scalar_lea.vmem [#allocation10], %s1720
          %1722 = dma.done %s1718, 512
        $region125: #{tpu_custom_call.1} parent=120 // pred_fallthru
          _
      $region121: #{tpu_custom_call.1} parent=5 // pred_fallthru
        _
    $region6: #{tpu_custom_call.1} parent=1 // loop_footer
      %s24 = sadd.s32 1, %s20
    $region7: #{tpu_custom_call.1} parent=1 // loop_footer_branch
      %19 = sbr.rel target = $region3
    $region8: #{tpu_custom_call.1} parent=1 // loop_exit
      _
    %1723 = vsyncpa [#allocation6], 1
    %s1724 = scalar_lea.sflag [#allocation6], 1
    %1725 = vsyncpa %s1724, 1
    %1726 = vsyncpa [#allocation7], 1
    %s1727 = scalar_lea.sflag [#allocation7], 1
    %1728 = vsyncpa %s1727, 1
    %1729 = vsyncpa [#allocation8], 1
    %s1730 = scalar_lea.sflag [#allocation8], 1
    %1731 = vsyncpa %s1730, 1

</llo_original>
